<compile_context>
chip_gen: v7x
topology: tpu7x:2x2x1
jax: 0.10.0
libtpu: 0.0.40
codegen_flags: <defaults>
</compile_context>

<pallas_src>
import jax
import jax.numpy as jnp
from jax.experimental import pallas as pl
from jax.experimental.pallas import tpu as pltpu

# ---------------- synthetic config (small shapes) ----------------
BATCH = 2
SEQ = 8
HIDDEN = 32
NUM_HEADS = 2
HEAD_DIM = HIDDEN // NUM_HEADS
INTER = 64
VOCAB = 64
EPS = 1e-6
NEG_INF = -1e9
VMEM_LIMIT = 32 * 1024 * 1024   # explicit scoped-VMEM budget (v7x-safe)


# ---------------- helpers ----------------
def _rmsnorm(x, w):
    var = jnp.mean(x * x, axis=-1, keepdims=True)
    return x * jax.lax.rsqrt(var + EPS) * w


def _rotate_half(x):
    h = x.shape[-1] // 2
    return jnp.concatenate([-x[..., h:], x[..., :h]], axis=-1)


# ---------------- Pallas kernel 1: decoder layer, gridded over batch ----------------
def decoder_layer_kernel(x_ref, pad_ref, cos_ref, sin_ref,
                         ln1_ref, wq_ref, wk_ref, wv_ref, wo_ref,
                         ln2_ref, wg_ref, wu_ref, wd_ref, fln_ref,
                         out_ref):
    f32 = jnp.float32
    bf16 = jnp.bfloat16
    S = x_ref.shape[1]
    half = HEAD_DIM // 2

    x = x_ref[0]                                     # [S, H] f32 (this batch)
    cos = cos_ref[...][:, None, :]                   # [S, 1, HD] -> broadcast over heads
    sin = sin_ref[...][:, None, :]

    # --- self-attention ---
    h = _rmsnorm(x, ln1_ref[...])
    hb = h.astype(bf16)                              # bf16 MXU operands, f32 accumulate
    q = jnp.dot(hb, wq_ref[...], preferred_element_type=f32)
    k = jnp.dot(hb, wk_ref[...], preferred_element_type=f32)
    v = jnp.dot(hb, wv_ref[...], preferred_element_type=f32)

    q3 = q.reshape(S, NUM_HEADS, HEAD_DIM)
    k3 = k.reshape(S, NUM_HEADS, HEAD_DIM)
    v3 = v.reshape(S, NUM_HEADS, HEAD_DIM)

    # RoPE applied in-kernel (no duplicated Wq/Wk copies, no extra matmuls).
    # TODO(synk): at HEAD_DIM >= 128 use pltpu.roll(x, HEAD_DIM//2, axis=-1) * sign (XLU).
    def rope(t):
        rot = jnp.concatenate([-t[..., half:], t[..., :half]], axis=-1)
        return t * cos + rot * sin

    qz = pltpu.einshape("shd->hsd", rope(q3).astype(bf16))   # [NH, S, HD]
    kz = pltpu.einshape("shd->hsd", rope(k3).astype(bf16))
    vz = pltpu.einshape("shd->hsd", v3.astype(bf16))

    # per-batch causal + key-padding mask (S x S only, built from iota in-kernel)
    pad = pad_ref[0, :, :] > 0.0                     # [1, S]
    ri = jax.lax.broadcasted_iota(jnp.int32, (S, S), 0)
    ci = jax.lax.broadcasted_iota(jnp.int32, (S, S), 1)
    allowed = (ci <= ri) & pad                       # [S, S]

    scale = 1.0 / (HEAD_DIM ** 0.5)
    sc = jnp.einsum("hqd,hkd->hqk", qz, kz, preferred_element_type=f32) * scale
    sc = jnp.where(allowed[None, :, :], sc, NEG_INF)
    sc = sc - jnp.max(sc, axis=-1, keepdims=True)
    p = jnp.exp(sc)
    p = p * pl.reciprocal(jnp.sum(p, axis=-1, keepdims=True), approx=True)  # EUP
    ctxz = jnp.einsum("hqk,hkd->hqd", p.astype(bf16), vz, preferred_element_type=f32)
    ctx = pltpu.einshape("hsd->shd", ctxz).reshape(S, HIDDEN)
    x = x + jnp.dot(ctx.astype(bf16), wo_ref[...], preferred_element_type=f32)

    # --- gated MLP (SiLU) ---
    h2 = _rmsnorm(x, ln2_ref[...])
    h2b = h2.astype(bf16)
    g = jnp.dot(h2b, wg_ref[...], preferred_element_type=f32)
    u = jnp.dot(h2b, wu_ref[...], preferred_element_type=f32)
    act = g * pl.reciprocal(1.0 + jnp.exp(-g), approx=True)                 # SiLU
    x = x + jnp.dot((act * u).astype(bf16), wd_ref[...], preferred_element_type=f32)

    # --- final norm, bf16 writeback (halves hidden-slab HBM traffic) ---
    out_ref[0] = _rmsnorm(x, fln_ref[...]).astype(out_ref.dtype)


def run_decoder_layer(x_bsh, pad_b1s, cos_sd, sin_sd, kernel_weights):
    B, S, H = x_bsh.shape
    weight_specs = [pl.BlockSpec(w.shape, lambda b: (0, 0)) for w in kernel_weights]
    return pl.pallas_call(
        decoder_layer_kernel,
        out_shape=jax.ShapeDtypeStruct((B, S, H), jnp.bfloat16),
        grid=(B,),
        in_specs=[
            pl.BlockSpec((1, S, H), lambda b: (b, 0, 0)),          # hidden (this batch)
            pl.BlockSpec((1, 1, S), lambda b: (b, 0, 0)),          # key-padding row
            pl.BlockSpec((S, HEAD_DIM), lambda b: (0, 0)),         # cos (fetched once)
            pl.BlockSpec((S, HEAD_DIM), lambda b: (0, 0)),         # sin (fetched once)
            *weight_specs,                                         # weights (fetched once)
        ],
        out_specs=pl.BlockSpec((1, S, H), lambda b: (b, 0, 0)),
        compiler_params=pltpu.CompilerParams(
            dimension_semantics=("parallel",),                     # batch across TCs on v7x
            vmem_limit_bytes=VMEM_LIMIT,
        ),
    )(x_bsh, pad_b1s, cos_sd, sin_sd, *kernel_weights)


# ---------------- Pallas kernel 2: prefill query-row gather (via DMA) + lm_head ----------------
def lm_head_prefill_kernel(qp_ref, hid_ref, w_ref, out_ref):
    # hid_ref is the [1, B, H] block the index_map already gathered at query_position.
    del qp_ref
    h = hid_ref[0].astype(jnp.bfloat16)                            # [B, H]
    out_ref[...] = jnp.dot(h, w_ref[...],
                           preferred_element_type=jnp.float32).astype(out_ref.dtype)


def run_lm_head_prefill(hidden_sbh, query_position, w_lm_bf16, tv=128):
    S, B, H = hidden_sbh.shape
    V = w_lm_bf16.shape[1]
    tv = min(tv, V)                                                # lane-dense at real V
    grid_spec = pltpu.PrefetchScalarGridSpec(
        num_scalar_prefetch=1,
        grid=(pl.cdiv(V, tv),),
        in_specs=[
            # dynamic gather of the query row done by the DMA itself (leading-dim index)
            pl.BlockSpec((1, B, H), lambda j, qp: (qp[0], 0, 0)),
            pl.BlockSpec((H, tv), lambda j, qp: (0, j)),           # stream vocab tiles
        ],
        out_specs=pl.BlockSpec((B, tv), lambda j, qp: (0, j)),
    )
    return pl.pallas_call(
        lm_head_prefill_kernel,
        out_shape=jax.ShapeDtypeStruct((B, V), jnp.float32),
        grid_spec=grid_spec,
        compiler_params=pltpu.CompilerParams(
            dimension_semantics=("parallel",),
            vmem_limit_bytes=VMEM_LIMIT,
        ),
    )(query_position, hidden_sbh, w_lm_bf16)


# ---------------- Pallas kernel 3: decode-phase lm_head over all positions ----------------
def lm_head_all_kernel(hid_ref, w_ref, out_ref):
    out_ref[...] = jnp.dot(hid_ref[...].astype(jnp.bfloat16), w_ref[...],
                           preferred_element_type=jnp.float32).astype(out_ref.dtype)


def run_lm_head_all(hidden2d, w_lm_bf16, tv=128):
    M, H = hidden2d.shape
    V = w_lm_bf16.shape[1]
    tv = min(tv, V)
    return pl.pallas_call(
        lm_head_all_kernel,
        out_shape=jax.ShapeDtypeStruct((M, V), jnp.float32),
        grid=(pl.cdiv(V, tv),),
        in_specs=[
            pl.BlockSpec((M, H), lambda j: (0, 0)),                # hidden (fetched once)
            pl.BlockSpec((H, tv), lambda j: (0, j)),               # stream vocab tiles
        ],
        out_specs=pl.BlockSpec((M, tv), lambda j: (0, j)),
        compiler_params=pltpu.CompilerParams(
            dimension_semantics=("parallel",),
            vmem_limit_bytes=VMEM_LIMIT,
        ),
    )(hidden2d, w_lm_bf16)


# ---------------- rotary embedding (plain-JAX glue, mirrors HF rotary_emb) ----------------
def make_rotary_emb(head_dim, base=10000.0):
    inv_freq = 1.0 / (base ** (jnp.arange(0, head_dim, 2, dtype=jnp.float32) / head_dim))

    def rotary_emb(positions):
        freqs = positions.astype(jnp.float32)[:, None] * inv_freq[None, :]
        emb = jnp.concatenate([freqs, freqs], axis=-1)             # [S, head_dim]
        return jnp.cos(emb), jnp.sin(emb)

    return rotary_emb


# ---------------- the wrapper module ----------------
class DecoderOnlyForCausalLM:
    """JAX/Pallas port of the RBLN DecoderOnlyForCausalLM wrapper."""

    def __init__(self, params):
        self.params = params
        self._phase = "prefill"
        ln1, wq, wk, wv, wo, ln2, wg, wu, wd, fln = params["layer"]
        bf = lambda w: w.astype(jnp.bfloat16)
        # host-side weight prep: bf16 MXU operands only (no rotate-half duplicates)
        self._kernel_weights = (ln1, bf(wq), bf(wk), bf(wv), bf(wo),
                                ln2, bf(wg), bf(wu), bf(wd), fln)
        self._lm_head_bf16 = bf(params["lm_head"])

    @property
    def phase(self):
        return self._phase

    @phase.setter
    def phase(self, phase):
        self._phase = phase

    def __call__(self, input_ids=None, inputs_embeds=None, attention_mask=None,
                 cache_position=None, query_position=None, past_key_values=None,
                 rotary_emb=None, block_tables=None):
        p = self.params
        # TODO(synk): past_key_values / block_tables (paged KV-cache update) are not modeled;
        # the synthetic DecoderOnlyModel runs one self-attention layer over the prompt.
        if inputs_embeds is None:
            inputs_embeds = jnp.take(p["embed"], input_ids, axis=0)      # [B, S, H]
        B, S, H = inputs_embeds.shape
        if cache_position is None:
            cache_position = jnp.arange(S, dtype=jnp.int32)
        cos, sin = rotary_emb(cache_position)                            # [S, HEAD_DIM]

        pad_b1s = attention_mask.astype(jnp.float32).reshape(B, 1, S)    # key-padding flags only
        hidden = run_decoder_layer(inputs_embeds.astype(jnp.float32), pad_b1s,
                                   cos, sin, self._kernel_weights)       # [B, S, H] bf16

        V = p["lm_head"].shape[1]
        if self.phase == "prefill":
            # hidden_states[:, query_position.unsqueeze(0)] @ lm_head -> [B, 1, V]
            hidden_sbh = jnp.transpose(hidden, (1, 0, 2))                # [S, B, H]
            logits = run_lm_head_prefill(hidden_sbh, query_position.astype(jnp.int32),
                                         self._lm_head_bf16)
            return logits.reshape(B, 1, V)
        # decode phase: project every position
        return run_lm_head_all(hidden.reshape(B * S, H), self._lm_head_bf16).reshape(B, S, V)


# ---------------- deterministic parameter init ----------------
def init_params(key):
    keys = jax.random.split(key, 9)
    scale = 0.02

    def nrm(k, shape):
        return jax.random.normal(k, shape, jnp.float32) * scale

    return {
        "embed": nrm(keys[0], (VOCAB, HIDDEN)),
        "layer": (
            jnp.ones((1, HIDDEN), jnp.float32),      # input RMSNorm weight
            nrm(keys[1], (HIDDEN, HIDDEN)),          # wq
            nrm(keys[2], (HIDDEN, HIDDEN)),          # wk
            nrm(keys[3], (HIDDEN, HIDDEN)),          # wv
            nrm(keys[4], (HIDDEN, HIDDEN)),          # wo
            jnp.ones((1, HIDDEN), jnp.float32),      # post-attn RMSNorm weight
            nrm(keys[5], (HIDDEN, INTER)),           # gate proj
            nrm(keys[6], (HIDDEN, INTER)),           # up proj
            nrm(keys[7], (INTER, HIDDEN)),           # down proj
            jnp.ones((1, HIDDEN), jnp.float32),      # final RMSNorm weight
        ),
        "lm_head": nrm(keys[8], (HIDDEN, VOCAB)),    # x @ W == nn.Linear(H, V, bias=False)
    }


# ---------------- pure-JAX fp32 reference for validation ----------------
def reference_forward(params, input_ids, attention_mask, cache_position, rotary_emb):
    p = params
    x = jnp.take(p["embed"], input_ids, axis=0).astype(jnp.float32)
    B, S, H = x.shape
    cos, sin = rotary_emb(cache_position)
    causal = jnp.where(jnp.arange(S)[None, :] <= jnp.arange(S)[:, None], 0.0, NEG_INF)
    pad = jnp.where(attention_mask > 0, 0.0, NEG_INF)
    mask = causal[None, :, :] + pad[:, None, :]
    ln1, wq, wk, wv, wo, ln2, wg, wu, wd, fln = p["layer"]

    h = _rmsnorm(x, ln1)
    q = h @ wq
    k = h @ wk
    v = h @ wv
    scale = 1.0 / (HEAD_DIM ** 0.5)
    ctx = []
    for i in range(NUM_HEADS):
        sl = slice(i * HEAD_DIM, (i + 1) * HEAD_DIM)
        qh = q[..., sl] * cos + _rotate_half(q[..., sl]) * sin
        kh = k[..., sl] * cos + _rotate_half(k[..., sl]) * sin
        s = jnp.einsum("bqd,bkd->bqk", qh, kh) * scale + mask
        pr = jax.nn.softmax(s, axis=-1)
        ctx.append(jnp.einsum("bqk,bkd->bqd", pr, v[..., sl]))
    x = x + jnp.concatenate(ctx, axis=-1) @ wo
    h2 = _rmsnorm(x, ln2)
    g = h2 @ wg
    u = h2 @ wu
    x = x + (g * jax.nn.sigmoid(g) * u) @ wd
    hidden = _rmsnorm(x, fln)
    return hidden @ p["lm_head"]                                        # [B, S, V]


if __name__ == "__main__":
    key = jax.random.PRNGKey(0)
    pkey, ikey = jax.random.split(key)
    params = init_params(pkey)

    input_ids = jax.random.randint(ikey, (BATCH, SEQ), 0, VOCAB, dtype=jnp.int32)
    attention_mask = jnp.ones((BATCH, SEQ), jnp.float32)
    cache_position = jnp.arange(SEQ, dtype=jnp.int32)
    query_position = jnp.array([SEQ - 1], dtype=jnp.int32)   # torch 0-d scalar .unsqueeze(0)
    rotary_emb = make_rotary_emb(HEAD_DIM)

    model = DecoderOnlyForCausalLM(params)

    # prefill phase
    logits = model(input_ids=input_ids, attention_mask=attention_mask,
                   cache_position=cache_position, query_position=query_position,
                   rotary_emb=rotary_emb)
    logits = jax.block_until_ready(logits)

    # decode phase (projects every position in this synthetic setup)
    model.phase = "decode"
    logits_all = model(input_ids=input_ids, attention_mask=attention_mask,
                       cache_position=cache_position, query_position=query_position,
                       rotary_emb=rotary_emb)
    logits_all = jax.block_until_ready(logits_all)

    ref_all = reference_forward(params, input_ids, attention_mask, cache_position, rotary_emb)
    ref_prefill = ref_all[:, query_position]                             # [B, 1, V]

    assert logits.shape == (BATCH, 1, VOCAB), logits.shape
    assert logits_all.shape == (BATCH, SEQ, VOCAB), logits_all.shape
    # tolerance covers bf16 MXU operands + bf16 hidden writeback + EUP approx reciprocal
    err = float(jnp.max(jnp.abs(logits - ref_prefill)))
    err_all = float(jnp.max(jnp.abs(logits_all - ref_all)))
    assert jnp.allclose(logits, ref_prefill, rtol=5e-2, atol=2e-2), err
    assert jnp.allclose(logits_all, ref_all, rtol=5e-2, atol=2e-2), err_all
    print("KERNEL_OK")
</pallas_src>

<mosaic_0001>
module attributes {stable_mosaic.version = 11 : i64} {
  func.func @decoder_layer_kernel(%arg0: i32, %arg1: memref<1x8x32xf32, #tpu.memory_space<vmem>>, %arg2: memref<1x1x8xf32, #tpu.memory_space<vmem>>, %arg3: memref<8x16xf32, #tpu.memory_space<vmem>>, %arg4: memref<8x16xf32, #tpu.memory_space<vmem>>, %arg5: memref<1x32xf32, #tpu.memory_space<vmem>>, %arg6: memref<32x32xbf16, #tpu.memory_space<vmem>>, %arg7: memref<32x32xbf16, #tpu.memory_space<vmem>>, %arg8: memref<32x32xbf16, #tpu.memory_space<vmem>>, %arg9: memref<32x32xbf16, #tpu.memory_space<vmem>>, %arg10: memref<1x32xf32, #tpu.memory_space<vmem>>, %arg11: memref<32x64xbf16, #tpu.memory_space<vmem>>, %arg12: memref<32x64xbf16, #tpu.memory_space<vmem>>, %arg13: memref<64x32xbf16, #tpu.memory_space<vmem>>, %arg14: memref<1x32xf32, #tpu.memory_space<vmem>>, %arg15: memref<1x8x32xbf16, #tpu.memory_space<vmem>>) attributes {dimension_semantics = [#tpu.dimension_semantics<parallel>], iteration_bounds = array<i64: 2>, scalar_prefetch = 0 : i64, scratch_operands = 0 : i64, tpu.core_type = #tpu.core_type<tc>, window_params = [{transform_indices = @transform_0, window_bounds = array<i64: 1, 8, 32>}, {transform_indices = @transform_1, window_bounds = array<i64: 1, 1, 8>}, {pipeline_mode = #tpu.pipeline_mode<synchronous>, transform_indices = @transform_2, window_bounds = array<i64: 8, 16>}, {pipeline_mode = #tpu.pipeline_mode<synchronous>, transform_indices = @transform_3, window_bounds = array<i64: 8, 16>}, {pipeline_mode = #tpu.pipeline_mode<synchronous>, transform_indices = @transform_4, window_bounds = array<i64: 1, 32>}, {pipeline_mode = #tpu.pipeline_mode<synchronous>, transform_indices = @transform_5, window_bounds = array<i64: 32, 32>}, {pipeline_mode = #tpu.pipeline_mode<synchronous>, transform_indices = @transform_6, window_bounds = array<i64: 32, 32>}, {pipeline_mode = #tpu.pipeline_mode<synchronous>, transform_indices = @transform_7, window_bounds = array<i64: 32, 32>}, {pipeline_mode = #tpu.pipeline_mode<synchronous>, transform_indices = @transform_8, window_bounds = array<i64: 32, 32>}, {pipeline_mode = #tpu.pipeline_mode<synchronous>, transform_indices = @transform_9, window_bounds = array<i64: 1, 32>}, {pipeline_mode = #tpu.pipeline_mode<synchronous>, transform_indices = @transform_10, window_bounds = array<i64: 32, 64>}, {pipeline_mode = #tpu.pipeline_mode<synchronous>, transform_indices = @transform_11, window_bounds = array<i64: 32, 64>}, {pipeline_mode = #tpu.pipeline_mode<synchronous>, transform_indices = @transform_12, window_bounds = array<i64: 64, 32>}, {pipeline_mode = #tpu.pipeline_mode<synchronous>, transform_indices = @transform_13, window_bounds = array<i64: 1, 32>}, {transform_indices = @transform_14, window_bounds = array<i64: 1, 8, 32>}]} {
    %c0 = arith.constant 0 : index
    %c0_0 = arith.constant 0 : index
    %c0_1 = arith.constant 0 : index
    %0 = vector.load %arg1[%c0, %c0_0, %c0_1] : memref<1x8x32xf32, #tpu.memory_space<vmem>>, vector<1x8x32xf32>
    %1 = vector.shape_cast %0 : vector<1x8x32xf32> to vector<8x32xf32>
    %c0_2 = arith.constant 0 : index
    %c0_3 = arith.constant 0 : index
    %2 = vector.load %arg3[%c0_2, %c0_3] : memref<8x16xf32, #tpu.memory_space<vmem>>, vector<8x16xf32>
    %3 = vector.shape_cast %2 : vector<8x16xf32> to vector<8x1x16xf32>
    %c0_4 = arith.constant 0 : index
    %c0_5 = arith.constant 0 : index
    %4 = vector.load %arg4[%c0_4, %c0_5] : memref<8x16xf32, #tpu.memory_space<vmem>>, vector<8x16xf32>
    %5 = vector.shape_cast %4 : vector<8x16xf32> to vector<8x1x16xf32>
    %c0_6 = arith.constant 0 : index
    %c0_7 = arith.constant 0 : index
    %6 = vector.load %arg5[%c0_6, %c0_7] : memref<1x32xf32, #tpu.memory_space<vmem>>, vector<1x32xf32>
    %7 = arith.mulf %1, %1 : vector<8x32xf32>
    %cst = arith.constant dense<0.000000e+00> : vector<8xf32>
    %8 = vector.multi_reduction <add>, %7, %cst [1] : vector<8x32xf32> to vector<8xf32>
    %9 = vector.shape_cast %8 : vector<8xf32> to vector<8x1xf32>
    %cst_8 = arith.constant 3.200000e+01 : f32
    %10 = vector.broadcast %cst_8 : f32 to vector<8x1xf32>
    %11 = arith.divf %9, %10 : vector<8x1xf32>
    %cst_9 = arith.constant 9.99999997E-7 : f32
    %12 = vector.broadcast %cst_9 : f32 to vector<8x1xf32>
    %13 = arith.addf %11, %12 : vector<8x1xf32>
    %14 = math.rsqrt %13 : vector<8x1xf32>
    %15 = vector.broadcast %14 : vector<8x1xf32> to vector<8x32xf32>
    %16 = arith.mulf %1, %15 : vector<8x32xf32>
    %17 = vector.broadcast %6 : vector<1x32xf32> to vector<8x32xf32>
    %18 = arith.mulf %16, %17 : vector<8x32xf32>
    %19 = arith.truncf %18 : vector<8x32xf32> to vector<8x32xbf16>
    %c0_10 = arith.constant 0 : index
    %c0_11 = arith.constant 0 : index
    %20 = vector.load %arg6[%c0_10, %c0_11] : memref<32x32xbf16, #tpu.memory_space<vmem>>, vector<32x32xbf16>
    %cst_12 = arith.constant dense<0.000000e+00> : vector<8x32xf32>
    %21 = tpu.matmul %19, %20, %cst_12 {dimension_numbers = #tpu.dot_dimension_numbers<[1], [0], [0], [1], [0, 0, 1, 1], [], []>} : vector<8x32xbf16>, vector<32x32xbf16>, vector<8x32xf32> -> vector<8x32xf32>
    %c0_13 = arith.constant 0 : index
    %c0_14 = arith.constant 0 : index
    %22 = vector.load %arg7[%c0_13, %c0_14] : memref<32x32xbf16, #tpu.memory_space<vmem>>, vector<32x32xbf16>
    %cst_15 = arith.constant dense<0.000000e+00> : vector<8x32xf32>
    %23 = tpu.matmul %19, %22, %cst_15 {dimension_numbers = #tpu.dot_dimension_numbers<[1], [0], [0], [1], [0, 0, 1, 1], [], []>} : vector<8x32xbf16>, vector<32x32xbf16>, vector<8x32xf32> -> vector<8x32xf32>
    %c0_16 = arith.constant 0 : index
    %c0_17 = arith.constant 0 : index
    %24 = vector.load %arg8[%c0_16, %c0_17] : memref<32x32xbf16, #tpu.memory_space<vmem>>, vector<32x32xbf16>
    %cst_18 = arith.constant dense<0.000000e+00> : vector<8x32xf32>
    %25 = tpu.matmul %19, %24, %cst_18 {dimension_numbers = #tpu.dot_dimension_numbers<[1], [0], [0], [1], [0, 0, 1, 1], [], []>} : vector<8x32xbf16>, vector<32x32xbf16>, vector<8x32xf32> -> vector<8x32xf32>
    %26 = vector.shape_cast %21 : vector<8x32xf32> to vector<8x2x16xf32>
    %27 = vector.shape_cast %23 : vector<8x32xf32> to vector<8x2x16xf32>
    %28 = vector.shape_cast %25 : vector<8x32xf32> to vector<8x2x16xf32>
    %29 = vector.extract_strided_slice %26 {offsets = [0, 0, 8], sizes = [8, 2, 8], strides = [1, 1, 1]} : vector<8x2x16xf32> to vector<8x2x8xf32>
    %cst_19 = arith.constant 0.000000e+00 : f32
    %30 = vector.broadcast %cst_19 : f32 to vector<8x2x8xf32>
    %31 = arith.subf %30, %29 : vector<8x2x8xf32>
    %32 = vector.extract_strided_slice %26 {offsets = [0, 0, 0], sizes = [8, 2, 8], strides = [1, 1, 1]} : vector<8x2x16xf32> to vector<8x2x8xf32>
    %33 = tpu.concatenate %31, %32 in 2 : vector<8x2x8xf32>, vector<8x2x8xf32> -> vector<8x2x16xf32>
    %34 = vector.broadcast %3 : vector<8x1x16xf32> to vector<8x2x16xf32>
    %35 = arith.mulf %26, %34 : vector<8x2x16xf32>
    %36 = vector.broadcast %5 : vector<8x1x16xf32> to vector<8x2x16xf32>
    %37 = arith.mulf %33, %36 : vector<8x2x16xf32>
    %38 = arith.addf %35, %37 : vector<8x2x16xf32>
    %39 = arith.truncf %38 : vector<8x2x16xf32> to vector<8x2x16xbf16>
    %40 = tpu.transpose %39, [1, 0, 2] : vector<8x2x16xbf16> -> vector<2x8x16xbf16>
    %41 = vector.extract_strided_slice %27 {offsets = [0, 0, 8], sizes = [8, 2, 8], strides = [1, 1, 1]} : vector<8x2x16xf32> to vector<8x2x8xf32>
    %cst_20 = arith.constant 0.000000e+00 : f32
    %42 = vector.broadcast %cst_20 : f32 to vector<8x2x8xf32>
    %43 = arith.subf %42, %41 : vector<8x2x8xf32>
    %44 = vector.extract_strided_slice %27 {offsets = [0, 0, 0], sizes = [8, 2, 8], strides = [1, 1, 1]} : vector<8x2x16xf32> to vector<8x2x8xf32>
    %45 = tpu.concatenate %43, %44 in 2 : vector<8x2x8xf32>, vector<8x2x8xf32> -> vector<8x2x16xf32>
    %46 = vector.broadcast %3 : vector<8x1x16xf32> to vector<8x2x16xf32>
    %47 = arith.mulf %27, %46 : vector<8x2x16xf32>
    %48 = vector.broadcast %5 : vector<8x1x16xf32> to vector<8x2x16xf32>
    %49 = arith.mulf %45, %48 : vector<8x2x16xf32>
    %50 = arith.addf %47, %49 : vector<8x2x16xf32>
    %51 = arith.truncf %50 : vector<8x2x16xf32> to vector<8x2x16xbf16>
    %52 = tpu.transpose %51, [1, 0, 2] : vector<8x2x16xbf16> -> vector<2x8x16xbf16>
    %53 = arith.truncf %28 : vector<8x2x16xf32> to vector<8x2x16xbf16>
    %54 = tpu.transpose %53, [1, 0, 2] : vector<8x2x16xbf16> -> vector<2x8x16xbf16>
    %c0_21 = arith.constant 0 : index
    %c0_22 = arith.constant 0 : index
    %c0_23 = arith.constant 0 : index
    %55 = vector.load %arg2[%c0_21, %c0_22, %c0_23] : memref<1x1x8xf32, #tpu.memory_space<vmem>>, vector<1x1x8xf32>
    %56 = vector.shape_cast %55 : vector<1x1x8xf32> to vector<1x8xf32>
    %cst_24 = arith.constant 0.000000e+00 : f32
    %57 = vector.broadcast %cst_24 : f32 to vector<1x8xf32>
    %58 = arith.cmpf ogt, %56, %57 : vector<1x8xf32>
    %59 = tpu.iota {dimensions = array<i32: 0>} : vector<8x8xi32>
    %60 = tpu.iota {dimensions = array<i32: 1>} : vector<8x8xi32>
    %61 = arith.cmpi sle, %60, %59 : vector<8x8xi32>
    %62 = vector.broadcast %58 : vector<1x8xi1> to vector<8x8xi1>
    %63 = arith.andi %61, %62 : vector<8x8xi1>
    "tpu.trace_start"() <{level = 10 : i32, message = "hqd,hkd->hqk"}> : () -> ()
    %cst_25 = arith.constant dense<0.000000e+00> : vector<2x8x8xf32>
    %64 = tpu.matmul %40, %52, %cst_25 {dimension_numbers = #tpu.dot_dimension_numbers<[2], [2], [1], [1], [0, 0, 0, 1, 1, 1], [0], [0]>} : vector<2x8x16xbf16>, vector<2x8x16xbf16>, vector<2x8x8xf32> -> vector<2x8x8xf32>
    "tpu.trace_stop"() : () -> ()
    %cst_26 = arith.constant 2.500000e-01 : f32
    %65 = vector.broadcast %cst_26 : f32 to vector<2x8x8xf32>
    %66 = arith.mulf %64, %65 : vector<2x8x8xf32>
    %67 = vector.shape_cast %63 : vector<8x8xi1> to vector<1x8x8xi1>
    %cst_27 = arith.constant -1.000000e+09 : f32
    %68 = vector.shape_cast %67 : vector<1x8x8xi1> to vector<1x8x8xi1>
    %69 = vector.broadcast %68 : vector<1x8x8xi1> to vector<2x8x8xi1>
    %70 = vector.broadcast %cst_27 : f32 to vector<2x8x8xf32>
    %71 = arith.select %69, %66, %70 : vector<2x8x8xi1>, vector<2x8x8xf32>
    %cst_28 = arith.constant dense<0xFF800000> : vector<2x8xf32>
    %72 = vector.multi_reduction <maximumf>, %71, %cst_28 [2] : vector<2x8x8xf32> to vector<2x8xf32>
    %73 = vector.shape_cast %72 : vector<2x8xf32> to vector<2x8x1xf32>
    %74 = vector.broadcast %73 : vector<2x8x1xf32> to vector<2x8x8xf32>
    %75 = arith.subf %71, %74 : vector<2x8x8xf32>
    %76 = math.exp %75 : vector<2x8x8xf32>
    %cst_29 = arith.constant dense<0.000000e+00> : vector<2x8xf32>
    %77 = vector.multi_reduction <add>, %76, %cst_29 [2] : vector<2x8x8xf32> to vector<2x8xf32>
    %78 = vector.shape_cast %77 : vector<2x8xf32> to vector<2x8x1xf32>
    %79 = tpu.reciprocal %78 {approx = true} : vector<2x8x1xf32> -> vector<2x8x1xf32>
    %80 = vector.broadcast %79 : vector<2x8x1xf32> to vector<2x8x8xf32>
    %81 = arith.mulf %76, %80 : vector<2x8x8xf32>
    %82 = arith.truncf %81 : vector<2x8x8xf32> to vector<2x8x8xbf16>
    "tpu.trace_start"() <{level = 10 : i32, message = "hqk,hkd->hqd"}> : () -> ()
    %cst_30 = arith.constant dense<0.000000e+00> : vector<2x8x16xf32>
    %83 = tpu.matmul %82, %54, %cst_30 {dimension_numbers = #tpu.dot_dimension_numbers<[2], [1], [1], [2], [0, 0, 0, 1, 1, 2], [0], [0]>} : vector<2x8x8xbf16>, vector<2x8x16xbf16>, vector<2x8x16xf32> -> vector<2x8x16xf32>
    "tpu.trace_stop"() : () -> ()
    %84 = tpu.transpose %83, [1, 0, 2] : vector<2x8x16xf32> -> vector<8x2x16xf32>
    %85 = vector.shape_cast %84 : vector<8x2x16xf32> to vector<8x32xf32>
    %86 = arith.truncf %85 : vector<8x32xf32> to vector<8x32xbf16>
    %c0_31 = arith.constant 0 : index
    %c0_32 = arith.constant 0 : index
    %87 = vector.load %arg9[%c0_31, %c0_32] : memref<32x32xbf16, #tpu.memory_space<vmem>>, vector<32x32xbf16>
    %cst_33 = arith.constant dense<0.000000e+00> : vector<8x32xf32>
    %88 = tpu.matmul %86, %87, %cst_33 {dimension_numbers = #tpu.dot_dimension_numbers<[1], [0], [0], [1], [0, 0, 1, 1], [], []>} : vector<8x32xbf16>, vector<32x32xbf16>, vector<8x32xf32> -> vector<8x32xf32>
    %89 = arith.addf %1, %88 : vector<8x32xf32>
    %c0_34 = arith.constant 0 : index
    %c0_35 = arith.constant 0 : index
    %90 = vector.load %arg10[%c0_34, %c0_35] : memref<1x32xf32, #tpu.memory_space<vmem>>, vector<1x32xf32>
    %91 = arith.mulf %89, %89 : vector<8x32xf32>
    %cst_36 = arith.constant dense<0.000000e+00> : vector<8xf32>
    %92 = vector.multi_reduction <add>, %91, %cst_36 [1] : vector<8x32xf32> to vector<8xf32>
    %93 = vector.shape_cast %92 : vector<8xf32> to vector<8x1xf32>
    %cst_37 = arith.constant 3.200000e+01 : f32
    %94 = vector.broadcast %cst_37 : f32 to vector<8x1xf32>
    %95 = arith.divf %93, %94 : vector<8x1xf32>
    %cst_38 = arith.constant 9.99999997E-7 : f32
    %96 = vector.broadcast %cst_38 : f32 to vector<8x1xf32>
    %97 = arith.addf %95, %96 : vector<8x1xf32>
    %98 = math.rsqrt %97 : vector<8x1xf32>
    %99 = vector.broadcast %98 : vector<8x1xf32> to vector<8x32xf32>
    %100 = arith.mulf %89, %99 : vector<8x32xf32>
    %101 = vector.broadcast %90 : vector<1x32xf32> to vector<8x32xf32>
    %102 = arith.mulf %100, %101 : vector<8x32xf32>
    %103 = arith.truncf %102 : vector<8x32xf32> to vector<8x32xbf16>
    %c0_39 = arith.constant 0 : index
    %c0_40 = arith.constant 0 : index
    %104 = vector.load %arg11[%c0_39, %c0_40] : memref<32x64xbf16, #tpu.memory_space<vmem>>, vector<32x64xbf16>
    %cst_41 = arith.constant dense<0.000000e+00> : vector<8x64xf32>
    %105 = tpu.matmul %103, %104, %cst_41 {dimension_numbers = #tpu.dot_dimension_numbers<[1], [0], [0], [1], [0, 0, 1, 1], [], []>} : vector<8x32xbf16>, vector<32x64xbf16>, vector<8x64xf32> -> vector<8x64xf32>
    %c0_42 = arith.constant 0 : index
    %c0_43 = arith.constant 0 : index
    %106 = vector.load %arg12[%c0_42, %c0_43] : memref<32x64xbf16, #tpu.memory_space<vmem>>, vector<32x64xbf16>
    %cst_44 = arith.constant dense<0.000000e+00> : vector<8x64xf32>
    %107 = tpu.matmul %103, %106, %cst_44 {dimension_numbers = #tpu.dot_dimension_numbers<[1], [0], [0], [1], [0, 0, 1, 1], [], []>} : vector<8x32xbf16>, vector<32x64xbf16>, vector<8x64xf32> -> vector<8x64xf32>
    %cst_45 = arith.constant 0.000000e+00 : f32
    %108 = vector.broadcast %cst_45 : f32 to vector<8x64xf32>
    %109 = arith.subf %108, %105 : vector<8x64xf32>
    %110 = math.exp %109 : vector<8x64xf32>
    %cst_46 = arith.constant 1.000000e+00 : f32
    %111 = vector.broadcast %cst_46 : f32 to vector<8x64xf32>
    %112 = arith.addf %111, %110 : vector<8x64xf32>
    %113 = tpu.reciprocal %112 {approx = true} : vector<8x64xf32> -> vector<8x64xf32>
    %114 = arith.mulf %105, %113 : vector<8x64xf32>
    %115 = arith.mulf %114, %107 : vector<8x64xf32>
    %116 = arith.truncf %115 : vector<8x64xf32> to vector<8x64xbf16>
    %c0_47 = arith.constant 0 : index
    %c0_48 = arith.constant 0 : index
    %117 = vector.load %arg13[%c0_47, %c0_48] : memref<64x32xbf16, #tpu.memory_space<vmem>>, vector<64x32xbf16>
    %cst_49 = arith.constant dense<0.000000e+00> : vector<8x32xf32>
    %118 = tpu.matmul %116, %117, %cst_49 {dimension_numbers = #tpu.dot_dimension_numbers<[1], [0], [0], [1], [0, 0, 1, 1], [], []>} : vector<8x64xbf16>, vector<64x32xbf16>, vector<8x32xf32> -> vector<8x32xf32>
    %119 = arith.addf %89, %118 : vector<8x32xf32>
    %c0_50 = arith.constant 0 : index
    %c0_51 = arith.constant 0 : index
    %120 = vector.load %arg14[%c0_50, %c0_51] : memref<1x32xf32, #tpu.memory_space<vmem>>, vector<1x32xf32>
    %121 = arith.mulf %119, %119 : vector<8x32xf32>
    %cst_52 = arith.constant dense<0.000000e+00> : vector<8xf32>
    %122 = vector.multi_reduction <add>, %121, %cst_52 [1] : vector<8x32xf32> to vector<8xf32>
    %123 = vector.shape_cast %122 : vector<8xf32> to vector<8x1xf32>
    %cst_53 = arith.constant 3.200000e+01 : f32
    %124 = vector.broadcast %cst_53 : f32 to vector<8x1xf32>
    %125 = arith.divf %123, %124 : vector<8x1xf32>
    %cst_54 = arith.constant 9.99999997E-7 : f32
    %126 = vector.broadcast %cst_54 : f32 to vector<8x1xf32>
    %127 = arith.addf %125, %126 : vector<8x1xf32>
    %128 = math.rsqrt %127 : vector<8x1xf32>
    %129 = vector.broadcast %128 : vector<8x1xf32> to vector<8x32xf32>
    %130 = arith.mulf %119, %129 : vector<8x32xf32>
    %131 = vector.broadcast %120 : vector<1x32xf32> to vector<8x32xf32>
    %132 = arith.mulf %130, %131 : vector<8x32xf32>
    %133 = arith.truncf %132 : vector<8x32xf32> to vector<8x32xbf16>
    %c0_55 = arith.constant 0 : index
    %c0_56 = arith.constant 0 : index
    %c0_57 = arith.constant 0 : index
    %134 = vector.load %arg15[%c0_55, %c0_56, %c0_57] : memref<1x8x32xbf16, #tpu.memory_space<vmem>>, vector<1x8x32xbf16>
    %135 = vector.shape_cast %134 : vector<1x8x32xbf16> to vector<8x32xbf16>
    %136 = vector.shape_cast %133 : vector<8x32xbf16> to vector<1x8x32xbf16>
    tpu.vector_store %arg15[%c0_55, %c0_56, %c0_57], %136 {strides = array<i32>} : memref<1x8x32xbf16, #tpu.memory_space<vmem>>, vector<1x8x32xbf16>,
    return
  }
  func.func @transform_0(%arg0: i32) -> (i32, i32, i32) {
    %c0_i32 = arith.constant 0 : i32
    %c0_i32_0 = arith.constant 0 : i32
    %c0_i32_1 = arith.constant 0 : i32
    return %arg0, %c0_i32, %c0_i32_0 : i32, i32, i32
  }
  func.func @transform_1(%arg0: i32) -> (i32, i32, i32) {
    %c0_i32 = arith.constant 0 : i32
    %c0_i32_0 = arith.constant 0 : i32
    %c0_i32_1 = arith.constant 0 : i32
    return %arg0, %c0_i32, %c0_i32_0 : i32, i32, i32
  }
  func.func @transform_2(%arg0: i32) -> (i32, i32) {
    %c0_i32 = arith.constant 0 : i32
    %c0_i32_0 = arith.constant 0 : i32
    %c0_i32_1 = arith.constant 0 : i32
    return %c0_i32, %c0_i32_0 : i32, i32
  }
  func.func @transform_3(%arg0: i32) -> (i32, i32) {
    %c0_i32 = arith.constant 0 : i32
    %c0_i32_0 = arith.constant 0 : i32
    %c0_i32_1 = arith.constant 0 : i32
    return %c0_i32, %c0_i32_0 : i32, i32
  }
  func.func @transform_4(%arg0: i32) -> (i32, i32) {
    %c0_i32 = arith.constant 0 : i32
    %c0_i32_0 = arith.constant 0 : i32
    %c0_i32_1 = arith.constant 0 : i32
    return %c0_i32, %c0_i32_0 : i32, i32
  }
  func.func @transform_5(%arg0: i32) -> (i32, i32) {
    %c0_i32 = arith.constant 0 : i32
    %c0_i32_0 = arith.constant 0 : i32
    %c0_i32_1 = arith.constant 0 : i32
    return %c0_i32, %c0_i32_0 : i32, i32
  }
  func.func @transform_6(%arg0: i32) -> (i32, i32) {
    %c0_i32 = arith.constant 0 : i32
    %c0_i32_0 = arith.constant 0 : i32
    %c0_i32_1 = arith.constant 0 : i32
    return %c0_i32, %c0_i32_0 : i32, i32
  }
  func.func @transform_7(%arg0: i32) -> (i32, i32) {
    %c0_i32 = arith.constant 0 : i32
    %c0_i32_0 = arith.constant 0 : i32
    %c0_i32_1 = arith.constant 0 : i32
    return %c0_i32, %c0_i32_0 : i32, i32
  }
  func.func @transform_8(%arg0: i32) -> (i32, i32) {
    %c0_i32 = arith.constant 0 : i32
    %c0_i32_0 = arith.constant 0 : i32
    %c0_i32_1 = arith.constant 0 : i32
    return %c0_i32, %c0_i32_0 : i32, i32
  }
  func.func @transform_9(%arg0: i32) -> (i32, i32) {
    %c0_i32 = arith.constant 0 : i32
    %c0_i32_0 = arith.constant 0 : i32
    %c0_i32_1 = arith.constant 0 : i32
    return %c0_i32, %c0_i32_0 : i32, i32
  }
  func.func @transform_10(%arg0: i32) -> (i32, i32) {
    %c0_i32 = arith.constant 0 : i32
    %c0_i32_0 = arith.constant 0 : i32
    %c0_i32_1 = arith.constant 0 : i32
    return %c0_i32, %c0_i32_0 : i32, i32
  }
  func.func @transform_11(%arg0: i32) -> (i32, i32) {
    %c0_i32 = arith.constant 0 : i32
    %c0_i32_0 = arith.constant 0 : i32
    %c0_i32_1 = arith.constant 0 : i32
    return %c0_i32, %c0_i32_0 : i32, i32
  }
  func.func @transform_12(%arg0: i32) -> (i32, i32) {
    %c0_i32 = arith.constant 0 : i32
    %c0_i32_0 = arith.constant 0 : i32
    %c0_i32_1 = arith.constant 0 : i32
    return %c0_i32, %c0_i32_0 : i32, i32
  }
  func.func @transform_13(%arg0: i32) -> (i32, i32) {
    %c0_i32 = arith.constant 0 : i32
    %c0_i32_0 = arith.constant 0 : i32
    %c0_i32_1 = arith.constant 0 : i32
    return %c0_i32, %c0_i32_0 : i32, i32
  }
  func.func @transform_14(%arg0: i32) -> (i32, i32, i32) {
    %c0_i32 = arith.constant 0 : i32
    %c0_i32_0 = arith.constant 0 : i32
    %c0_i32_1 = arith.constant 0 : i32
    return %arg0, %c0_i32, %c0_i32_0 : i32, i32, i32
  }
}

</mosaic_0001>

<llo_original>
// kernel: tpu_custom_call.1
$region0: #{tpu_custom_call.1}
  #allocation0 [shape = 'u32[]', space=smem, size = 0x4, offset = 0x4, fixed_abs, tag = 'smem constant byte address 0x4 - core index']
  #allocation1 [shape = 'u32[144,128]{1,0:T(1,128)}', space=vmem, size = 0x12000, scoped, tag = 'internal scratch']
  %s0 = inlined_call_operand.vmem [shape: f32[2,8,32], index: 0, kind: input, shape index: {}]
  %s1 = inlined_call_operand.vmem [shape: f32[2,1,8], index: 1, kind: input, shape index: {}]
  %s2 = inlined_call_operand.hbm [shape: f32[8,16], index: 2, kind: input, shape index: {}]
  %s3 = inlined_call_operand.hbm [shape: f32[8,16], index: 3, kind: input, shape index: {}]
  %s4 = inlined_call_operand.hbm [shape: f32[1,32], index: 4, kind: input, shape index: {}]
  %s5 = inlined_call_operand.vmem [shape: bf16[32,32], index: 5, kind: input, shape index: {}]
  %s6 = inlined_call_operand.vmem [shape: bf16[32,32], index: 6, kind: input, shape index: {}]
  %s7 = inlined_call_operand.hbm [shape: bf16[32,32], index: 7, kind: input, shape index: {}]
  %s8 = inlined_call_operand.hbm [shape: bf16[32,32], index: 8, kind: input, shape index: {}]
  %s9 = inlined_call_operand.hbm [shape: f32[1,32], index: 9, kind: input, shape index: {}]
  %s10 = inlined_call_operand.vmem [shape: bf16[32,64], index: 10, kind: input, shape index: {}]
  %s11 = inlined_call_operand.hbm [shape: bf16[32,64], index: 11, kind: input, shape index: {}]
  %s12 = inlined_call_operand.vmem [shape: bf16[64,32], index: 12, kind: input, shape index: {}]
  %s13 = inlined_call_operand.vmem [shape: f32[1,32], index: 13, kind: input, shape index: {}]
  %s14 = inlined_call_operand.hbm [shape: bf16[2,8,32], index: 14, kind: output, shape index: {}]
  %s15 = sld [smem:[#allocation0]]
  $region117: #{tpu_custom_call.1} parent=0
    _
  %s17 = ssub.s32 1, %s15
  %s18 = scalar_select 0, %s17, %s15
  $region1: #{tpu_custom_call.1} parent=0
    #allocation2 [shape = 'u8[4096]{0}', space=vmem, size = 0x1000, scoped, tag = 'input window, operand 2, single buffered']
    #allocation3 [shape = 's32[2]{0}', space=sflag, size = 0x8, scoped, tag = 'scoped memory for tpu_custom_call.1']
    #allocation4 [shape = 's32[2]{0}', space=sflag, size = 0x8, scoped, tag = 'scoped memory for tpu_custom_call.1']
    #allocation5 [shape = 'u8[4096]{0}', space=vmem, size = 0x1000, scoped, tag = 'input window, operand 3, single buffered']
    #allocation6 [shape = 's32[1]{0}', space=sflag, size = 0x4, scoped, tag = 'scoped memory for tpu_custom_call.1']
    #allocation7 [shape = 'u8[512]{0}', space=vmem, size = 0x400, scoped, tag = 'input window, operand 4, single buffered']
    #allocation8 [shape = 'u8[8192]{0}', space=vmem, size = 0x2000, scoped, tag = 'input window, operand 7, single buffered']
    #allocation9 [shape = 's32[1]{0}', space=sflag, size = 0x4, scoped, tag = 'scoped memory for tpu_custom_call.1']
    #allocation10 [shape = 'u8[8192]{0}', space=vmem, size = 0x2000, scoped, tag = 'input window, operand 8, single buffered']
    #allocation11 [shape = 'u8[512]{0}', space=vmem, size = 0x400, scoped, tag = 'input window, operand 9, single buffered']
    #allocation12 [shape = 's32[1]{0}', space=sflag, size = 0x4, scoped, tag = 'scoped memory for tpu_custom_call.1']
    #allocation13 [shape = 'u8[8192]{0}', space=vmem, size = 0x2000, scoped, tag = 'input window, operand 11, single buffered']
    #allocation14 [shape = 'u8[4096]{0}', space=vmem, size = 0x1000, scoped, tag = 'output window, operand 0']
    %19 = vsyncpa [#allocation3], 0
    %20 = vsyncpa [#allocation6], 0
    %21 = vsyncpa [#allocation9], 0
    %22 = vsyncpa [#allocation12], 0
    %23 = vsyncpa [#allocation4], 0
    %s24 = scalar_lea.sflag [#allocation4], 1
    %25 = vsyncpa %s24, 0
    loop: start=0, step=1, limit=4
    $region2: #{tpu_custom_call.1} parent=1 // loop_pre_header
      _
    $region3: #{tpu_custom_call.1} parent=1 // loop_header
      %s27 = sphi 0, %s31
      %p28 = scmp.ge.s32.totalorder %s27, 4
      %s37 = sphi 0, %s39
      %s40 = sphi 0, %s37
      %s41 = sphi 0, %s40
      %s57 = sphi 0, %s41
      %s63 = sphi 0, %s65
      %s66 = sphi 0, %s63
      %s67 = sphi 0, %s66
      %s83 = sphi 0, %s67
      %s87 = sphi 0, %s87
      %s89 = sphi 0, %s87
      %s90 = sphi 0, %s89
      %s104 = sphi 0, %s90
      %s108 = sphi 0, %s108
      %s110 = sphi 0, %s108
      %s111 = sphi 0, %s110
      %s125 = sphi 0, %s111
      %s129 = sphi 0, %s129
      %s131 = sphi 0, %s129
      %s132 = sphi 0, %s131
      %s146 = sphi 0, %s132
      %s150 = sphi 0, %s150
      %s152 = sphi 0, %s150
      %s153 = sphi 0, %s152
      %s167 = sphi 0, %s153
      %s171 = sphi 0, %s171
      %s173 = sphi 0, %s171
      %s174 = sphi 0, %s173
      %s188 = sphi 0, %s174
      %s192 = sphi 0, %s192
      %s194 = sphi 0, %s192
      %s195 = sphi 0, %s194
      %s209 = sphi 0, %s195
      %s213 = sphi 0, %s213
      %s215 = sphi 0, %s213
      %s216 = sphi 0, %s215
      %s230 = sphi 0, %s216
      %s234 = sphi 0, %s234
      %s236 = sphi 0, %s234
      %s237 = sphi 0, %s236
      %s251 = sphi 0, %s237
      %s255 = sphi 0, %s255
      %s257 = sphi 0, %s255
      %s258 = sphi 0, %s257
      %s272 = sphi 0, %s258
      %s276 = sphi 0, %s276
      %s278 = sphi 0, %s276
      %s279 = sphi 0, %s278
      %s293 = sphi 0, %s279
      %s297 = sphi 0, %s297
      %s299 = sphi 0, %s297
      %s300 = sphi 0, %s299
      %s314 = sphi 0, %s300
      %s318 = sphi 0, %s318
      %s320 = sphi 0, %s318
      %s321 = sphi 0, %s320
      %s335 = sphi 0, %s321
      %s341 = sphi 0, %s343
      %s344 = sphi 0, %s341
      %s345 = sphi 0, %s344
      %s361 = sphi 0, %s345
    $region4: #{tpu_custom_call.1} parent=1 // loop_header_branch
      %30 = sbr.rel (%p28) target = $region8
    $region5: #{tpu_custom_call.1} parent=1 // loop_body
      %s32 = ssub.s32 %s27, 1
      %s33 = ssub.s32 %s27, 2
      %s34 = sadd.s32 %s27, 1
      %s35 = ssub.s32 %s27, %s34
      %p36 = scmp.eq.s32.totalorder %s35, 0
      %s38 = sadd.s32 %s37, 1
      %s39 = scalar_select %p36, %s37, %s38
      %p42 = pneg %p36
      %p43 = scmp.eq.s32.totalorder %s27, 1
      %p44 = por %p42, %p43
      %p45 = scmp.ne.s32.totalorder %s37, %s40
      %p46 = scmp.eq.s32.totalorder %s27, 0
      %p47 = por %p45, %p46
      %p48 = scmp.ne.s32.totalorder %s37, %s40
      %p49 = scmp.eq.s32.totalorder %s32, 1
      %p50 = por %p48, %p49
      %p51 = scmp.ne.s32.totalorder %s40, %s41
      %p52 = scmp.eq.s32.totalorder %s32, 0
      %p53 = por %p51, %p52
      %p54 = scmp.ne.s32.totalorder %s40, %s41
      %p55 = scmp.eq.s32.totalorder %s33, 1
      %p56 = por %p54, %p55
      %p58 = scmp.ne.s32.totalorder %s41, %s57
      %p59 = scmp.eq.s32.totalorder %s33, 0
      %p60 = por %p58, %p59
      %s61 = ssub.s32 %s27, %s34
      %p62 = scmp.eq.s32.totalorder %s61, 0
      %s64 = sadd.s32 %s63, 1
      %s65 = scalar_select %p62, %s63, %s64
      %p68 = pneg %p62
      %p69 = scmp.eq.s32.totalorder %s27, 1
      %p70 = por %p68, %p69
      %p71 = scmp.ne.s32.totalorder %s63, %s66
      %p72 = scmp.eq.s32.totalorder %s27, 0
      %p73 = por %p71, %p72
      %p74 = scmp.ne.s32.totalorder %s63, %s66
      %p75 = scmp.eq.s32.totalorder %s32, 1
      %p76 = por %p74, %p75
      %p77 = scmp.ne.s32.totalorder %s66, %s67
      %p78 = scmp.eq.s32.totalorder %s32, 0
      %p79 = por %p77, %p78
      %p80 = scmp.ne.s32.totalorder %s66, %s67
      %p81 = scmp.eq.s32.totalorder %s33, 1
      %p82 = por %p80, %p81
      %p84 = scmp.ne.s32.totalorder %s67, %s83
      %p85 = scmp.eq.s32.totalorder %s33, 0
      %p86 = por %p84, %p85
      %s88 = sadd.s32 %s87, 1
      %p91 = scmp.eq.s32.totalorder %s27, 1
      %p92 = scmp.ne.s32.totalorder %s87, %s89
      %p93 = scmp.eq.s32.totalorder %s27, 0
      %p94 = por %p92, %p93
      %p95 = scmp.ne.s32.totalorder %s87, %s89
      %p96 = scmp.eq.s32.totalorder %s32, 1
      %p97 = por %p95, %p96
      %p98 = scmp.ne.s32.totalorder %s89, %s90
      %p99 = scmp.eq.s32.totalorder %s32, 0
      %p100 = por %p98, %p99
      %p101 = scmp.ne.s32.totalorder %s89, %s90
      %p102 = scmp.eq.s32.totalorder %s33, 1
      %p103 = por %p101, %p102
      %p105 = scmp.ne.s32.totalorder %s90, %s104
      %p106 = scmp.eq.s32.totalorder %s33, 0
      %p107 = por %p105, %p106
      %s109 = sadd.s32 %s108, 1
      %p112 = scmp.eq.s32.totalorder %s27, 1
      %p113 = scmp.ne.s32.totalorder %s108, %s110
      %p114 = scmp.eq.s32.totalorder %s27, 0
      %p115 = por %p113, %p114
      %p116 = scmp.ne.s32.totalorder %s108, %s110
      %p117 = scmp.eq.s32.totalorder %s32, 1
      %p118 = por %p116, %p117
      %p119 = scmp.ne.s32.totalorder %s110, %s111
      %p120 = scmp.eq.s32.totalorder %s32, 0
      %p121 = por %p119, %p120
      %p122 = scmp.ne.s32.totalorder %s110, %s111
      %p123 = scmp.eq.s32.totalorder %s33, 1
      %p124 = por %p122, %p123
      %p126 = scmp.ne.s32.totalorder %s111, %s125
      %p127 = scmp.eq.s32.totalorder %s33, 0
      %p128 = por %p126, %p127
      %s130 = sadd.s32 %s129, 1
      %p133 = scmp.eq.s32.totalorder %s27, 1
      %p134 = scmp.ne.s32.totalorder %s129, %s131
      %p135 = scmp.eq.s32.totalorder %s27, 0
      %p136 = por %p134, %p135
      %p137 = scmp.ne.s32.totalorder %s129, %s131
      %p138 = scmp.eq.s32.totalorder %s32, 1
      %p139 = por %p137, %p138
      %p140 = scmp.ne.s32.totalorder %s131, %s132
      %p141 = scmp.eq.s32.totalorder %s32, 0
      %p142 = por %p140, %p141
      %p143 = scmp.ne.s32.totalorder %s131, %s132
      %p144 = scmp.eq.s32.totalorder %s33, 1
      %p145 = por %p143, %p144
      %p147 = scmp.ne.s32.totalorder %s132, %s146
      %p148 = scmp.eq.s32.totalorder %s33, 0
      %p149 = por %p147, %p148
      %s151 = sadd.s32 %s150, 1
      %p154 = scmp.eq.s32.totalorder %s27, 1
      %p155 = scmp.ne.s32.totalorder %s150, %s152
      %p156 = scmp.eq.s32.totalorder %s27, 0
      %p157 = por %p155, %p156
      %p158 = scmp.ne.s32.totalorder %s150, %s152
      %p159 = scmp.eq.s32.totalorder %s32, 1
      %p160 = por %p158, %p159
      %p161 = scmp.ne.s32.totalorder %s152, %s153
      %p162 = scmp.eq.s32.totalorder %s32, 0
      %p163 = por %p161, %p162
      %p164 = scmp.ne.s32.totalorder %s152, %s153
      %p165 = scmp.eq.s32.totalorder %s33, 1
      %p166 = por %p164, %p165
      %p168 = scmp.ne.s32.totalorder %s153, %s167
      %p169 = scmp.eq.s32.totalorder %s33, 0
      %p170 = por %p168, %p169
      %s172 = sadd.s32 %s171, 1
      %p175 = scmp.eq.s32.totalorder %s27, 1
      %p176 = scmp.ne.s32.totalorder %s171, %s173
      %p177 = scmp.eq.s32.totalorder %s27, 0
      %p178 = por %p176, %p177
      %p179 = scmp.ne.s32.totalorder %s171, %s173
      %p180 = scmp.eq.s32.totalorder %s32, 1
      %p181 = por %p179, %p180
      %p182 = scmp.ne.s32.totalorder %s173, %s174
      %p183 = scmp.eq.s32.totalorder %s32, 0
      %p184 = por %p182, %p183
      %p185 = scmp.ne.s32.totalorder %s173, %s174
      %p186 = scmp.eq.s32.totalorder %s33, 1
      %p187 = por %p185, %p186
      %p189 = scmp.ne.s32.totalorder %s174, %s188
      %p190 = scmp.eq.s32.totalorder %s33, 0
      %p191 = por %p189, %p190
      %s193 = sadd.s32 %s192, 1
      %p196 = scmp.eq.s32.totalorder %s27, 1
      %p197 = scmp.ne.s32.totalorder %s192, %s194
      %p198 = scmp.eq.s32.totalorder %s27, 0
      %p199 = por %p197, %p198
      %p200 = scmp.ne.s32.totalorder %s192, %s194
      %p201 = scmp.eq.s32.totalorder %s32, 1
      %p202 = por %p200, %p201
      %p203 = scmp.ne.s32.totalorder %s194, %s195
      %p204 = scmp.eq.s32.totalorder %s32, 0
      %p205 = por %p203, %p204
      %p206 = scmp.ne.s32.totalorder %s194, %s195
      %p207 = scmp.eq.s32.totalorder %s33, 1
      %p208 = por %p206, %p207
      %p210 = scmp.ne.s32.totalorder %s195, %s209
      %p211 = scmp.eq.s32.totalorder %s33, 0
      %p212 = por %p210, %p211
      %s214 = sadd.s32 %s213, 1
      %p217 = scmp.eq.s32.totalorder %s27, 1
      %p218 = scmp.ne.s32.totalorder %s213, %s215
      %p219 = scmp.eq.s32.totalorder %s27, 0
      %p220 = por %p218, %p219
      %p221 = scmp.ne.s32.totalorder %s213, %s215
      %p222 = scmp.eq.s32.totalorder %s32, 1
      %p223 = por %p221, %p222
      %p224 = scmp.ne.s32.totalorder %s215, %s216
      %p225 = scmp.eq.s32.totalorder %s32, 0
      %p226 = por %p224, %p225
      %p227 = scmp.ne.s32.totalorder %s215, %s216
      %p228 = scmp.eq.s32.totalorder %s33, 1
      %p229 = por %p227, %p228
      %p231 = scmp.ne.s32.totalorder %s216, %s230
      %p232 = scmp.eq.s32.totalorder %s33, 0
      %p233 = por %p231, %p232
      %s235 = sadd.s32 %s234, 1
      %p238 = scmp.eq.s32.totalorder %s27, 1
      %p239 = scmp.ne.s32.totalorder %s234, %s236
      %p240 = scmp.eq.s32.totalorder %s27, 0
      %p241 = por %p239, %p240
      %p242 = scmp.ne.s32.totalorder %s234, %s236
      %p243 = scmp.eq.s32.totalorder %s32, 1
      %p244 = por %p242, %p243
      %p245 = scmp.ne.s32.totalorder %s236, %s237
      %p246 = scmp.eq.s32.totalorder %s32, 0
      %p247 = por %p245, %p246
      %p248 = scmp.ne.s32.totalorder %s236, %s237
      %p249 = scmp.eq.s32.totalorder %s33, 1
      %p250 = por %p248, %p249
      %p252 = scmp.ne.s32.totalorder %s237, %s251
      %p253 = scmp.eq.s32.totalorder %s33, 0
      %p254 = por %p252, %p253
      %s256 = sadd.s32 %s255, 1
      %p259 = scmp.eq.s32.totalorder %s27, 1
      %p260 = scmp.ne.s32.totalorder %s255, %s257
      %p261 = scmp.eq.s32.totalorder %s27, 0
      %p262 = por %p260, %p261
      %p263 = scmp.ne.s32.totalorder %s255, %s257
      %p264 = scmp.eq.s32.totalorder %s32, 1
      %p265 = por %p263, %p264
      %p266 = scmp.ne.s32.totalorder %s257, %s258
      %p267 = scmp.eq.s32.totalorder %s32, 0
      %p268 = por %p266, %p267
      %p269 = scmp.ne.s32.totalorder %s257, %s258
      %p270 = scmp.eq.s32.totalorder %s33, 1
      %p271 = por %p269, %p270
      %p273 = scmp.ne.s32.totalorder %s258, %s272
      %p274 = scmp.eq.s32.totalorder %s33, 0
      %p275 = por %p273, %p274
      %s277 = sadd.s32 %s276, 1
      %p280 = scmp.eq.s32.totalorder %s27, 1
      %p281 = scmp.ne.s32.totalorder %s276, %s278
      %p282 = scmp.eq.s32.totalorder %s27, 0
      %p283 = por %p281, %p282
      %p284 = scmp.ne.s32.totalorder %s276, %s278
      %p285 = scmp.eq.s32.totalorder %s32, 1
      %p286 = por %p284, %p285
      %p287 = scmp.ne.s32.totalorder %s278, %s279
      %p288 = scmp.eq.s32.totalorder %s32, 0
      %p289 = por %p287, %p288
      %p290 = scmp.ne.s32.totalorder %s278, %s279
      %p291 = scmp.eq.s32.totalorder %s33, 1
      %p292 = por %p290, %p291
      %p294 = scmp.ne.s32.totalorder %s279, %s293
      %p295 = scmp.eq.s32.totalorder %s33, 0
      %p296 = por %p294, %p295
      %s298 = sadd.s32 %s297, 1
      %p301 = scmp.eq.s32.totalorder %s27, 1
      %p302 = scmp.ne.s32.totalorder %s297, %s299
      %p303 = scmp.eq.s32.totalorder %s27, 0
      %p304 = por %p302, %p303
      %p305 = scmp.ne.s32.totalorder %s297, %s299
      %p306 = scmp.eq.s32.totalorder %s32, 1
      %p307 = por %p305, %p306
      %p308 = scmp.ne.s32.totalorder %s299, %s300
      %p309 = scmp.eq.s32.totalorder %s32, 0
      %p310 = por %p308, %p309
      %p311 = scmp.ne.s32.totalorder %s299, %s300
      %p312 = scmp.eq.s32.totalorder %s33, 1
      %p313 = por %p311, %p312
      %p315 = scmp.ne.s32.totalorder %s300, %s314
      %p316 = scmp.eq.s32.totalorder %s33, 0
      %p317 = por %p315, %p316
      %s319 = sadd.s32 %s318, 1
      %p322 = scmp.eq.s32.totalorder %s27, 1
      %p323 = scmp.ne.s32.totalorder %s318, %s320
      %p324 = scmp.eq.s32.totalorder %s27, 0
      %p325 = por %p323, %p324
      %p326 = scmp.ne.s32.totalorder %s318, %s320
      %p327 = scmp.eq.s32.totalorder %s32, 1
      %p328 = por %p326, %p327
      %p329 = scmp.ne.s32.totalorder %s320, %s321
      %p330 = scmp.eq.s32.totalorder %s32, 0
      %p331 = por %p329, %p330
      %p332 = scmp.ne.s32.totalorder %s320, %s321
      %p333 = scmp.eq.s32.totalorder %s33, 1
      %p334 = por %p332, %p333
      %p336 = scmp.ne.s32.totalorder %s321, %s335
      %p337 = scmp.eq.s32.totalorder %s33, 0
      %p338 = por %p336, %p337
      %s339 = ssub.s32 %s27, %s34
      %p340 = scmp.eq.s32.totalorder %s339, 0
      %s342 = sadd.s32 %s341, 1
      %s343 = scalar_select %p340, %s341, %s342
      %p346 = pneg %p340
      %p347 = scmp.eq.s32.totalorder %s27, 1
      %p348 = por %p346, %p347
      %p349 = scmp.ne.s32.totalorder %s341, %s344
      %p350 = scmp.eq.s32.totalorder %s27, 0
      %p351 = por %p349, %p350
      %p352 = scmp.ne.s32.totalorder %s341, %s344
      %p353 = scmp.eq.s32.totalorder %s32, 1
      %p354 = por %p352, %p353
      %p355 = scmp.ne.s32.totalorder %s344, %s345
      %p356 = scmp.eq.s32.totalorder %s32, 0
      %p357 = por %p355, %p356
      %p358 = scmp.ne.s32.totalorder %s344, %s345
      %p359 = scmp.eq.s32.totalorder %s33, 1
      %p360 = por %p358, %p359
      %p362 = scmp.ne.s32.totalorder %s345, %s361
      %p363 = scmp.eq.s32.totalorder %s33, 0
      %p364 = por %p362, %p363
      %p365 = scmp.le.s32.totalorder 1, %s27
      %p366 = scmp.lt.s32.totalorder %s27, 3
      %p367 = pnand %p365, %p366
      %p368 = pneg %p367
      // Predicated region
      $region9: #{tpu_custom_call.1} parent=5 // pred_check
        _
      $region10: #{tpu_custom_call.1} parent=5 // pred_check_branch
        %370 = sbr.rel (%p367) target = $region12
      $region11: #{tpu_custom_call.1} parent=5 // pred_region
        %s371 = ssub.s32 %s27, 1
        // Predicated region
        $region13: #{tpu_custom_call.1} parent=11 // pred_check
          %p372 = pneg %p100
        $region14: #{tpu_custom_call.1} parent=11 // pred_check_branch
          %374 = sbr.rel (%p372) target = $region16
        $region15: #{tpu_custom_call.1} parent=11 // pred_region
          %s376 = ssub.s32 128, 128
          %377 = vsyncadd [#allocation3], %s376
          %s379 = sshll.u32 [#allocation2], 4
          %s380 = int_to_ptr.vmem [resolvable:$true] %s379
          %382 = dma.hbm_to_vmem [thread:$0]  %s2, 128, %s380, [#allocation3]
        $region16: #{tpu_custom_call.1} parent=11 // pred_fallthru
          _
        // Predicated region
        $region17: #{tpu_custom_call.1} parent=11 // pred_check
          %p383 = pneg %p121
        $region18: #{tpu_custom_call.1} parent=11 // pred_check_branch
          %385 = sbr.rel (%p383) target = $region20
        $region19: #{tpu_custom_call.1} parent=11 // pred_region
          %s387 = ssub.s32 128, 128
          %388 = vsyncadd [#allocation6], %s387
          %s390 = sshll.u32 [#allocation5], 4
          %s391 = int_to_ptr.vmem [resolvable:$true] %s390
          %393 = dma.hbm_to_vmem [thread:$0]  %s3, 128, %s391, [#allocation6]
        $region20: #{tpu_custom_call.1} parent=11 // pred_fallthru
          _
        // Predicated region
        $region21: #{tpu_custom_call.1} parent=11 // pred_check
          %p394 = pneg %p142
        $region22: #{tpu_custom_call.1} parent=11 // pred_check_branch
          %396 = sbr.rel (%p394) target = $region24
        $region23: #{tpu_custom_call.1} parent=11 // pred_region
          %s398 = ssub.s32 16, 16
          %399 = vsyncadd [#allocation6], %s398
          %s401 = sshll.u32 [#allocation7], 4
          %s402 = int_to_ptr.vmem [resolvable:$true] %s401
          %404 = dma.hbm_to_vmem [thread:$0]  %s4, 16, %s402, [#allocation6]
        $region24: #{tpu_custom_call.1} parent=11 // pred_fallthru
          _
        // Predicated region
        $region25: #{tpu_custom_call.1} parent=11 // pred_check
          %p405 = pneg %p163
        $region26: #{tpu_custom_call.1} parent=11 // pred_check_branch
          %407 = sbr.rel (%p405) target = $region28
        $region27: #{tpu_custom_call.1} parent=11 // pred_region
          _
        $region28: #{tpu_custom_call.1} parent=11 // pred_fallthru
          _
        // Predicated region
        $region29: #{tpu_custom_call.1} parent=11 // pred_check
          %p408 = pneg %p184
        $region30: #{tpu_custom_call.1} parent=11 // pred_check_branch
          %410 = sbr.rel (%p408) target = $region32
        $region31: #{tpu_custom_call.1} parent=11 // pred_region
          _
        $region32: #{tpu_custom_call.1} parent=11 // pred_fallthru
          _
        // Predicated region
        $region33: #{tpu_custom_call.1} parent=11 // pred_check
          %p411 = pneg %p205
        $region34: #{tpu_custom_call.1} parent=11 // pred_check_branch
          %413 = sbr.rel (%p411) target = $region36
        $region35: #{tpu_custom_call.1} parent=11 // pred_region
          %s415 = ssub.s32 256, 256
          %416 = vsyncadd [#allocation9], %s415
          %s417 = sshll.u32 [#allocation8], 4
          %s418 = int_to_ptr.vmem [resolvable:$true] %s417
          %423 = dma.hbm_to_vmem [thread:$0]  %s7, 256, %s418, [#allocation9], 64, 64, 4
        $region36: #{tpu_custom_call.1} parent=11 // pred_fallthru
          _
        // Predicated region
        $region37: #{tpu_custom_call.1} parent=11 // pred_check
          %p424 = pneg %p226
        $region38: #{tpu_custom_call.1} parent=11 // pred_check_branch
          %426 = sbr.rel (%p424) target = $region40
        $region39: #{tpu_custom_call.1} parent=11 // pred_region
          %s428 = ssub.s32 256, 256
          %429 = vsyncadd [#allocation9], %s428
          %s430 = sshll.u32 [#allocation10], 4
          %s431 = int_to_ptr.vmem [resolvable:$true] %s430
          %436 = dma.hbm_to_vmem [thread:$0]  %s8, 256, %s431, [#allocation9], 64, 64, 4
        $region40: #{tpu_custom_call.1} parent=11 // pred_fallthru
          _
        // Predicated region
        $region41: #{tpu_custom_call.1} parent=11 // pred_check
          %p437 = pneg %p247
        $region42: #{tpu_custom_call.1} parent=11 // pred_check_branch
          %439 = sbr.rel (%p437) target = $region44
        $region43: #{tpu_custom_call.1} parent=11 // pred_region
          %s441 = ssub.s32 16, 16
          %442 = vsyncadd [#allocation12], %s441
          %s444 = sshll.u32 [#allocation11], 4
          %s445 = int_to_ptr.vmem [resolvable:$true] %s444
          %447 = dma.hbm_to_vmem [thread:$0]  %s9, 16, %s445, [#allocation12]
        $region44: #{tpu_custom_call.1} parent=11 // pred_fallthru
          _
        // Predicated region
        $region45: #{tpu_custom_call.1} parent=11 // pred_check
          %p448 = pneg %p268
        $region46: #{tpu_custom_call.1} parent=11 // pred_check_branch
          %450 = sbr.rel (%p448) target = $region48
        $region47: #{tpu_custom_call.1} parent=11 // pred_region
          _
        $region48: #{tpu_custom_call.1} parent=11 // pred_fallthru
          _
        // Predicated region
        $region49: #{tpu_custom_call.1} parent=11 // pred_check
          %p451 = pneg %p289
        $region50: #{tpu_custom_call.1} parent=11 // pred_check_branch
          %453 = sbr.rel (%p451) target = $region52
        $region51: #{tpu_custom_call.1} parent=11 // pred_region
          %s455 = ssub.s32 256, 256
          %456 = vsyncadd [#allocation12], %s455
          %s457 = sshll.u32 [#allocation13], 4
          %s458 = int_to_ptr.vmem [resolvable:$true] %s457
          %463 = dma.hbm_to_vmem [thread:$0]  %s11, 256, %s458, [#allocation12], 64, 64, 4
        $region52: #{tpu_custom_call.1} parent=11 // pred_fallthru
          _
        // Predicated region
        $region53: #{tpu_custom_call.1} parent=11 // pred_check
          %p464 = pneg %p310
        $region54: #{tpu_custom_call.1} parent=11 // pred_check_branch
          %466 = sbr.rel (%p464) target = $region56
        $region55: #{tpu_custom_call.1} parent=11 // pred_region
          _
        $region56: #{tpu_custom_call.1} parent=11 // pred_fallthru
          _
        // Predicated region
        $region57: #{tpu_custom_call.1} parent=11 // pred_check
          %p467 = pneg %p331
        $region58: #{tpu_custom_call.1} parent=11 // pred_check_branch
          %469 = sbr.rel (%p467) target = $region60
        $region59: #{tpu_custom_call.1} parent=11 // pred_region
          _
        $region60: #{tpu_custom_call.1} parent=11 // pred_fallthru
          _
      $region12: #{tpu_custom_call.1} parent=5 // pred_fallthru
        _
      %p470 = scmp.lt.s32.totalorder %s27, 2
      // Predicated region
      $region61: #{tpu_custom_call.1} parent=5 // pred_check
        %p471 = pneg %p470
      $region62: #{tpu_custom_call.1} parent=5 // pred_check_branch
        %473 = sbr.rel (%p471) target = $region64
      $region63: #{tpu_custom_call.1} parent=5 // pred_region
        // Predicated region
        $region65: #{tpu_custom_call.1} parent=63 // pred_check
          %p474 = pneg %p47
        $region66: #{tpu_custom_call.1} parent=63 // pred_check_branch
          %476 = sbr.rel (%p474) target = $region68
        $region67: #{tpu_custom_call.1} parent=63 // pred_region
          %p477 = scmp.lt.s32.totalorder %s27, 1
          %s478 = scalar_select %p477, %s27, 1
          %s479 = smul.addr %s478, 8
          %s480 = scalar_lea.vmem %s0, %s479
        $region68: #{tpu_custom_call.1} parent=63 // pred_fallthru
          _
        // Predicated region
        $region69: #{tpu_custom_call.1} parent=63 // pred_check
          %p481 = pneg %p73
        $region70: #{tpu_custom_call.1} parent=63 // pred_check_branch
          %483 = sbr.rel (%p481) target = $region72
        $region71: #{tpu_custom_call.1} parent=63 // pred_region
          %p484 = scmp.lt.s32.totalorder %s27, 1
          %s485 = scalar_select %p484, %s27, 1
          %s486 = scalar_lea.vmem %s1, %s485
        $region72: #{tpu_custom_call.1} parent=63 // pred_fallthru
          _
      $region64: #{tpu_custom_call.1} parent=5 // pred_fallthru
        _
      %p487 = scmp.le.s32.totalorder 1, %s27
      %p488 = scmp.lt.s32.totalorder %s27, 3
      %p489 = pnand %p487, %p488
      %p490 = pneg %p489
      // Predicated region
      $region73: #{tpu_custom_call.1} parent=5 // pred_check
        _
      $region74: #{tpu_custom_call.1} parent=5 // pred_check_branch
        %492 = sbr.rel (%p489) target = $region76
      $region75: #{tpu_custom_call.1} parent=5 // pred_region
        %s493 = ssub.s32 %s27, 1
        // Predicated region
        $region77: #{tpu_custom_call.1} parent=75 // pred_check
          %p494 = pneg %p100
        $region78: #{tpu_custom_call.1} parent=75 // pred_check_branch
          %496 = sbr.rel (%p494) target = $region80
        $region79: #{tpu_custom_call.1} parent=75 // pred_region
          %497 = dma.done [#allocation3], 128
        $region80: #{tpu_custom_call.1} parent=75 // pred_fallthru
          _
        // Predicated region
        $region81: #{tpu_custom_call.1} parent=75 // pred_check
          %p498 = pneg %p121
        $region82: #{tpu_custom_call.1} parent=75 // pred_check_branch
          %500 = sbr.rel (%p498) target = $region84
        $region83: #{tpu_custom_call.1} parent=75 // pred_region
          %501 = dma.done [#allocation6], 128
        $region84: #{tpu_custom_call.1} parent=75 // pred_fallthru
          _
        // Predicated region
        $region85: #{tpu_custom_call.1} parent=75 // pred_check
          %p502 = pneg %p142
        $region86: #{tpu_custom_call.1} parent=75 // pred_check_branch
          %504 = sbr.rel (%p502) target = $region88
        $region87: #{tpu_custom_call.1} parent=75 // pred_region
          %505 = dma.done [#allocation6], 16
        $region88: #{tpu_custom_call.1} parent=75 // pred_fallthru
          _
        // Predicated region
        $region89: #{tpu_custom_call.1} parent=75 // pred_check
          %p506 = pneg %p205
        $region90: #{tpu_custom_call.1} parent=75 // pred_check_branch
          %508 = sbr.rel (%p506) target = $region92
        $region91: #{tpu_custom_call.1} parent=75 // pred_region
          %509 = dma.done [#allocation9], 256
        $region92: #{tpu_custom_call.1} parent=75 // pred_fallthru
          _
        // Predicated region
        $region93: #{tpu_custom_call.1} parent=75 // pred_check
          %p510 = pneg %p226
        $region94: #{tpu_custom_call.1} parent=75 // pred_check_branch
          %512 = sbr.rel (%p510) target = $region96
        $region95: #{tpu_custom_call.1} parent=75 // pred_region
          %513 = dma.done [#allocation9], 256
        $region96: #{tpu_custom_call.1} parent=75 // pred_fallthru
          _
        // Predicated region
        $region97: #{tpu_custom_call.1} parent=75 // pred_check
          %p514 = pneg %p247
        $region98: #{tpu_custom_call.1} parent=75 // pred_check_branch
          %516 = sbr.rel (%p514) target = $region100
        $region99: #{tpu_custom_call.1} parent=75 // pred_region
          %517 = dma.done [#allocation12], 16
        $region100: #{tpu_custom_call.1} parent=75 // pred_fallthru
          _
        // Predicated region
        $region101: #{tpu_custom_call.1} parent=75 // pred_check
          %p518 = pneg %p289
        $region102: #{tpu_custom_call.1} parent=75 // pred_check_branch
          %520 = sbr.rel (%p518) target = $region104
        $region103: #{tpu_custom_call.1} parent=75 // pred_region
          %521 = dma.done [#allocation12], 256
        $region104: #{tpu_custom_call.1} parent=75 // pred_fallthru
          _
        %p522 = scmp.lt.s32.totalorder %s32, 1
        %s523 = scalar_select %p522, %s32, 1
        %s524 = smul.addr %s523, 8
        %s525 = scalar_lea.vmem %s0, %s524
        %p526 = pneg %p53
        %p527 = pneg %p50
        %p528 = scmp.lt.s32.totalorder %s32, 1
        %s529 = scalar_select %p528, %s32, 1
        %s530 = scalar_lea.vmem %s1, %s529
        %p531 = pneg %p79
        %p532 = pneg %p76
        %p533 = pneg %p100
        %p534 = pneg %p97
        %p535 = pneg %p121
        %p536 = pneg %p118
        %p537 = pneg %p142
        %p538 = pneg %p139
        %p539 = pneg %p163
        %p540 = pneg %p160
        %p541 = pneg %p184
        %p542 = pneg %p181
        %p543 = pneg %p205
        %p544 = pneg %p202
        %p545 = pneg %p226
        %p546 = pneg %p223
        %p547 = pneg %p247
        %p548 = pneg %p244
        %p549 = pneg %p268
        %p550 = pneg %p265
        %p551 = pneg %p289
        %p552 = pneg %p286
        %p553 = pneg %p310
        %p554 = pneg %p307
        %p555 = pneg %p331
        %p556 = pneg %p328
        %p557 = pneg %p357
        %p558 = pneg %p354
        %s559 = sand.u32 %s344, 1
        %s560 = scalar_lea.sflag [#allocation4], %s559
        %s561 = sand.u32 %s344, 1
        %s562 = smul.addr %s561, 4
        %s563 = scalar_lea.vmem [#allocation14], %s562
        %p564 = scmp.lt.s32.totalorder %s32, 1
        %s565 = scalar_select %p564, %s32, 1
        %s566 = smul.addr %s565, 8
        %s567 = scalar_lea.vmem %s0, %s566
        %p568 = scmp.lt.s32.totalorder %s32, 1
        %s569 = scalar_select %p568, %s32, 1
        %s570 = scalar_lea.vmem %s1, %s569
        %v572 = vld [vmem:[%s567] sm:$0xff]
        %v573 = vld [vmem:[#allocation2] sm:$0xff]
        %v575 = vcombine.high %v573, %v573
        %v577 = vunpack.c.l.s4 1966171168
        %v578 = vunpack.c.0.s8 %v577
        %v579 = vlaneseq
        %v580 = vshrl.u32 %v579, 7
        %v581 = vsub.s32 %v578, %v580
        %v582 = vrot.slane %v573, %v581
        %v584 = vunpack.c.l.s4 1966171168
        %v585 = vunpack.c.0.s8 %v584
        %v586 = vlaneseq
        %v587 = vshrl.u32 %v586, 7
        %v588 = vsub.s32 %v585, %v587
        %v589 = vrot.slane %v575, %v588
        %v590 = vcombine.high %v582, %v582
        %v591 = vcombine.high %v589, %v589
        %v593 = vunpack.c.l.s4 1966171168
        %v594 = vunpack.c.0.s8 %v593
        %v595 = vlaneseq
        %v596 = vshrl.u32 %v595, 7
        %v597 = vsub.s32 %v594, %v596
        %v598 = vrot.slane %v582, %v597
        %v600 = vunpack.c.l.s4 1966171168
        %v601 = vunpack.c.0.s8 %v600
        %v602 = vlaneseq
        %v603 = vshrl.u32 %v602, 7
        %v604 = vsub.s32 %v601, %v603
        %v605 = vrot.slane %v589, %v604
        %v607 = vunpack.c.l.s4 1966171168
        %v608 = vunpack.c.0.s8 %v607
        %v609 = vlaneseq
        %v610 = vshrl.u32 %v609, 7
        %v611 = vsub.s32 %v608, %v610
        %v612 = vrot.slane %v590, %v611
        %v614 = vunpack.c.l.s4 1966171168
        %v615 = vunpack.c.0.s8 %v614
        %v616 = vlaneseq
        %v617 = vshrl.u32 %v616, 7
        %v618 = vsub.s32 %v615, %v617
        %v619 = vrot.slane %v591, %v618
        %v620 = vcombine.high %v598, %v598
        %v621 = vcombine.high %v605, %v605
        %v622 = vcombine.high %v612, %v612
        %v623 = vcombine.high %v619, %v619
        %v624 = vld [vmem:[#allocation5] sm:$0xff]
        %v626 = vcombine.high %v624, %v624
        %v628 = vunpack.c.l.s4 1966171168
        %v629 = vunpack.c.0.s8 %v628
        %v630 = vlaneseq
        %v631 = vshrl.u32 %v630, 7
        %v632 = vsub.s32 %v629, %v631
        %v633 = vrot.slane %v624, %v632
        %v635 = vunpack.c.l.s4 1966171168
        %v636 = vunpack.c.0.s8 %v635
        %v637 = vlaneseq
        %v638 = vshrl.u32 %v637, 7
        %v639 = vsub.s32 %v636, %v638
        %v640 = vrot.slane %v626, %v639
        %v641 = vcombine.high %v633, %v633
        %v642 = vcombine.high %v640, %v640
        %v644 = vunpack.c.l.s4 1966171168
        %v645 = vunpack.c.0.s8 %v644
        %v646 = vlaneseq
        %v647 = vshrl.u32 %v646, 7
        %v648 = vsub.s32 %v645, %v647
        %v649 = vrot.slane %v633, %v648
        %v651 = vunpack.c.l.s4 1966171168
        %v652 = vunpack.c.0.s8 %v651
        %v653 = vlaneseq
        %v654 = vshrl.u32 %v653, 7
        %v655 = vsub.s32 %v652, %v654
        %v656 = vrot.slane %v640, %v655
        %v658 = vunpack.c.l.s4 1966171168
        %v659 = vunpack.c.0.s8 %v658
        %v660 = vlaneseq
        %v661 = vshrl.u32 %v660, 7
        %v662 = vsub.s32 %v659, %v661
        %v663 = vrot.slane %v641, %v662
        %v665 = vunpack.c.l.s4 1966171168
        %v666 = vunpack.c.0.s8 %v665
        %v667 = vlaneseq
        %v668 = vshrl.u32 %v667, 7
        %v669 = vsub.s32 %v666, %v668
        %v670 = vrot.slane %v642, %v669
        %v671 = vcombine.high %v649, %v649
        %v672 = vcombine.high %v656, %v656
        %v673 = vcombine.high %v663, %v663
        %v674 = vcombine.high %v670, %v670
        %v675 = vld [vmem:[#allocation7] sm:$0x1]
        %v676 = vmul.f32 %v572, %v572
        %vm677 = vcmask 261120
        %v678 = vsel %vm677, %v676, 0.0
        %679 = vadd.xlane.f32.xlu0 %v678
        %v680 = vpop.xlane.xlu0 %679
        %v681 = vrcp.pop 32.0
        %v682 = vmul.f32 %v680, %v681
        %v683 = vadd.f32 %v682, 1e-06
        %v684 = vrsqrt.pop %v683
        %v685 = vmul.f32 %v572, %v684
        %v687 = vlaneseq
        %v688 = vshrl.u32 %v687, 7
        %v689 = vsub.s32 0, %v688
        %v690 = vrot.slane %v675, %v689
        %v692 = vmul.f32 %v685, %v690
        %v693 = vpack.c.bf16 %v692, %v692
        %v694 = vld [vmem:[%s5] sm:$0xf]
        %v695 = vld [vmem:[%s5 + $0x4] sm:$0xf]
        %v696 = vld [vmem:[%s5 + $0x8] sm:$0xf]
        %v697 = vld [vmem:[%s5 + $0xc] sm:$0xf]
        %v702 = vunpack.c.l.b16 %v694
        %v703 = vunpack.c.l.b16 %v695
        %v704 = vunpack.c.l.b16 %v696
        %v705 = vunpack.c.l.b16 %v697
        %v706 = vpack.c.b16 %v703, %v702
        %v707 = vpack.c.b16 %v705, %v704
        %v711 = vsel %vm677, %v693, 0
        %713 = vmatprep.subr.bf16.mxu0 0
        %714 = vmatpush1.bf16.msra.mxu0 %v706
        %715 = vmatprep.subr.bf16.mxu0 0
        %716 = vmatpush1.bf16.msra.mxu0 %v707
        %717 = vmatprep.subr.bf16.mxu0 0
        %718 = vmatpush1.bf16.msra.mxu0 0
        %719 = vmatprep.subr.bf16.mxu0 0
        %720 = vmatpush1.bf16.msra.mxu0 0
        %721 = vmatprep.subr.bf16.mxu0 0
        %722 = vmatpush1.bf16.msra.mxu0 0
        %723 = vmatprep.subr.bf16.mxu0 0
        %724 = vmatpush1.bf16.msra.mxu0 0
        %725 = vmatprep.subr.bf16.mxu0 0
        %726 = vmatpush1.bf16.msra.mxu0 0
        %727 = vmatprep.subr.bf16.mxu0 0
        %728 = vmatpush1.bf16.msra.mxu0 0
        %729 = vmatprep.subr.bf16.mxu0 0
        %730 = vmatpush1.bf16.msra.mxu0 0
        %731 = vmatprep.subr.bf16.mxu0 0
        %732 = vmatpush1.bf16.msra.mxu0 0
        %733 = vmatprep.subr.bf16.mxu0 0
        %734 = vmatpush1.bf16.msra.mxu0 0
        %735 = vmatprep.subr.bf16.mxu0 0
        %736 = vmatpush1.bf16.msra.mxu0 0
        %737 = vmatprep.subr.bf16.mxu0 0
        %738 = vmatpush1.bf16.msra.mxu0 0
        %739 = vmatprep.subr.bf16.mxu0 0
        %740 = vmatpush1.bf16.msra.mxu0 0
        %741 = vmatprep.subr.bf16.mxu0 0
        %742 = vmatpush1.bf16.msra.mxu0 0
        %743 = vmatprep.subr.bf16.mxu0 0
        %744 = vmatpush1.bf16.msra.mxu0 0
        %745 = vmatprep.mubr.bf16.mxu0 0
        %746 = vmatmul.mubr.bf16.gmra.mrb[0].mxu0 %v711
        %v747 = vpop.f32.mrb[0].mxu0
        %v748 = vadd.f32 0.0, %v747
        %v749 = vpop.f32.mrb[0].mxu0
        %v750 = vpop.f32.mrb[0].mxu0
        %v751 = vpop.f32.mrb[0].mxu0
        %752 = vdwg.mxu0
        %v753 = vld [vmem:[%s6] sm:$0xf]
        %v754 = vld [vmem:[%s6 + $0x4] sm:$0xf]
        %v755 = vld [vmem:[%s6 + $0x8] sm:$0xf]
        %v756 = vld [vmem:[%s6 + $0xc] sm:$0xf]
        %v761 = vunpack.c.l.b16 %v753
        %v762 = vunpack.c.l.b16 %v754
        %v763 = vunpack.c.l.b16 %v755
        %v764 = vunpack.c.l.b16 %v756
        %v765 = vpack.c.b16 %v762, %v761
        %v766 = vpack.c.b16 %v764, %v763
        %769 = vmatprep.subr.bf16.mxu0 0
        %770 = vmatpush1.bf16.msra.mxu0 %v765
        %771 = vmatprep.subr.bf16.mxu0 0
        %772 = vmatpush1.bf16.msra.mxu0 %v766
        %773 = vmatprep.subr.bf16.mxu0 0
        %774 = vmatpush1.bf16.msra.mxu0 0
        %775 = vmatprep.subr.bf16.mxu0 0
        %776 = vmatpush1.bf16.msra.mxu0 0
        %777 = vmatprep.subr.bf16.mxu0 0
        %778 = vmatpush1.bf16.msra.mxu0 0
        %779 = vmatprep.subr.bf16.mxu0 0
        %780 = vmatpush1.bf16.msra.mxu0 0
        %781 = vmatprep.subr.bf16.mxu0 0
        %782 = vmatpush1.bf16.msra.mxu0 0
        %783 = vmatprep.subr.bf16.mxu0 0
        %784 = vmatpush1.bf16.msra.mxu0 0
        %785 = vmatprep.subr.bf16.mxu0 0
        %786 = vmatpush1.bf16.msra.mxu0 0
        %787 = vmatprep.subr.bf16.mxu0 0
        %788 = vmatpush1.bf16.msra.mxu0 0
        %789 = vmatprep.subr.bf16.mxu0 0
        %790 = vmatpush1.bf16.msra.mxu0 0
        %791 = vmatprep.subr.bf16.mxu0 0
        %792 = vmatpush1.bf16.msra.mxu0 0
        %793 = vmatprep.subr.bf16.mxu0 0
        %794 = vmatpush1.bf16.msra.mxu0 0
        %795 = vmatprep.subr.bf16.mxu0 0
        %796 = vmatpush1.bf16.msra.mxu0 0
        %797 = vmatprep.subr.bf16.mxu0 0
        %798 = vmatpush1.bf16.msra.mxu0 0
        %799 = vmatprep.subr.bf16.mxu0 0
        %800 = vmatpush1.bf16.msra.mxu0 0
        %801 = vmatprep.mubr.bf16.mxu0 0
        %802 = vmatmul.mubr.bf16.gmra.mrb[0].mxu0 %v711
        %v803 = vpop.f32.mrb[0].mxu0
        %v804 = vadd.f32 0.0, %v803
        %v805 = vpop.f32.mrb[0].mxu0
        %v806 = vpop.f32.mrb[0].mxu0
        %v807 = vpop.f32.mrb[0].mxu0
        %808 = vdwg.mxu0
        %v809 = vld [vmem:[#allocation8] sm:$0xf]
        %v810 = vld [vmem:[#allocation8 + $0x4] sm:$0xf]
        %v811 = vld [vmem:[#allocation8 + $0x8] sm:$0xf]
        %v812 = vld [vmem:[#allocation8 + $0xc] sm:$0xf]
        %v817 = vunpack.c.l.b16 %v809
        %v818 = vunpack.c.l.b16 %v810
        %v819 = vunpack.c.l.b16 %v811
        %v820 = vunpack.c.l.b16 %v812
        %v821 = vpack.c.b16 %v818, %v817
        %v822 = vpack.c.b16 %v820, %v819
        %825 = vmatprep.subr.bf16.mxu0 0
        %826 = vmatpush1.bf16.msra.mxu0 %v821
        %827 = vmatprep.subr.bf16.mxu0 0
        %828 = vmatpush1.bf16.msra.mxu0 %v822
        %829 = vmatprep.subr.bf16.mxu0 0
        %830 = vmatpush1.bf16.msra.mxu0 0
        %831 = vmatprep.subr.bf16.mxu0 0
        %832 = vmatpush1.bf16.msra.mxu0 0
        %833 = vmatprep.subr.bf16.mxu0 0
        %834 = vmatpush1.bf16.msra.mxu0 0
        %835 = vmatprep.subr.bf16.mxu0 0
        %836 = vmatpush1.bf16.msra.mxu0 0
        %837 = vmatprep.subr.bf16.mxu0 0
        %838 = vmatpush1.bf16.msra.mxu0 0
        %839 = vmatprep.subr.bf16.mxu0 0
        %840 = vmatpush1.bf16.msra.mxu0 0
        %841 = vmatprep.subr.bf16.mxu0 0
        %842 = vmatpush1.bf16.msra.mxu0 0
        %843 = vmatprep.subr.bf16.mxu0 0
        %844 = vmatpush1.bf16.msra.mxu0 0
        %845 = vmatprep.subr.bf16.mxu0 0
        %846 = vmatpush1.bf16.msra.mxu0 0
        %847 = vmatprep.subr.bf16.mxu0 0
        %848 = vmatpush1.bf16.msra.mxu0 0
        %849 = vmatprep.subr.bf16.mxu0 0
        %850 = vmatpush1.bf16.msra.mxu0 0
        %851 = vmatprep.subr.bf16.mxu0 0
        %852 = vmatpush1.bf16.msra.mxu0 0
        %853 = vmatprep.subr.bf16.mxu0 0
        %854 = vmatpush1.bf16.msra.mxu0 0
        %855 = vmatprep.subr.bf16.mxu0 0
        %856 = vmatpush1.bf16.msra.mxu0 0
        %857 = vmatprep.mubr.bf16.mxu0 0
        %858 = vmatmul.mubr.bf16.gmra.mrb[0].mxu0 %v711
        %v859 = vpop.f32.mrb[0].mxu0
        %v860 = vadd.f32 0.0, %v859
        %v861 = vpop.f32.mrb[0].mxu0
        %v862 = vpop.f32.mrb[0].mxu0
        %v863 = vpop.f32.mrb[0].mxu0
        %864 = vdwg.mxu0
        %866 = vrot.lane.b32.xlu0 %v748, 112
        %v867 = vpop.permute.xlu0 %866
        %v869 = vcombine.high %v748, 0.0
        %v871 = vunpack.c.l.s4 1983009808
        %v872 = vunpack.c.0.s8 %v871
        %v873 = vlaneseq
        %v874 = vshrl.u32 %v873, 7
        %v875 = vsub.s32 %v872, %v874
        %v876 = vrot.slane %v748, %v875
        %v878 = vunpack.c.l.s4 1983009808
        %v879 = vunpack.c.0.s8 %v878
        %v880 = vlaneseq
        %v881 = vshrl.u32 %v880, 7
        %v882 = vsub.s32 %v879, %v881
        %v883 = vrot.slane %v869, %v882
        %v884 = vcombine.high %v867, 0.0
        %v886 = vunpack.c.l.s4 1983009808
        %v887 = vunpack.c.0.s8 %v886
        %v888 = vlaneseq
        %v889 = vshrl.u32 %v888, 7
        %v890 = vsub.s32 %v887, %v889
        %v891 = vrot.slane %v867, %v890
        %v893 = vunpack.c.l.s4 1983009808
        %v894 = vunpack.c.0.s8 %v893
        %v895 = vlaneseq
        %v896 = vshrl.u32 %v895, 7
        %v897 = vsub.s32 %v894, %v896
        %v898 = vrot.slane %v884, %v897
        %v899 = vcombine.low %v876, %v891
        %v900 = vcombine.high %v876, %v891
        %v902 = vunpack.c.l.s4 1934713408
        %v903 = vunpack.c.0.s8 %v902
        %v904 = vlaneseq
        %v905 = vshrl.u32 %v904, 7
        %v906 = vsub.s32 %v903, %v905
        %v907 = vrot.slane %v899, %v906
        %v909 = vunpack.c.l.s4 1934713408
        %v910 = vunpack.c.0.s8 %v909
        %v911 = vlaneseq
        %v912 = vshrl.u32 %v911, 7
        %v913 = vsub.s32 %v910, %v912
        %v914 = vrot.slane %v900, %v913
        %v915 = vcombine.low %v883, %v898
        %v916 = vcombine.high %v883, %v898
        %v918 = vunpack.c.l.s4 1934713408
        %v919 = vunpack.c.0.s8 %v918
        %v920 = vlaneseq
        %v921 = vshrl.u32 %v920, 7
        %v922 = vsub.s32 %v919, %v921
        %v923 = vrot.slane %v915, %v922
        %v925 = vunpack.c.l.s4 1934713408
        %v926 = vunpack.c.0.s8 %v925
        %v927 = vlaneseq
        %v928 = vshrl.u32 %v927, 7
        %v929 = vsub.s32 %v926, %v928
        %v930 = vrot.slane %v916, %v929
        %v931 = vcombine.high %v907, 0.0
        %v932 = vcombine.high %v914, 0.0
        %v933 = vcombine.high %v923, 0.0
        %v934 = vcombine.high %v930, 0.0
        %936 = vrot.lane.b32.xlu0 %v804, 112
        %v937 = vpop.permute.xlu0 %936
        %v939 = vcombine.high %v804, 0.0
        %v941 = vunpack.c.l.s4 1983009808
        %v942 = vunpack.c.0.s8 %v941
        %v943 = vlaneseq
        %v944 = vshrl.u32 %v943, 7
        %v945 = vsub.s32 %v942, %v944
        %v946 = vrot.slane %v804, %v945
        %v948 = vunpack.c.l.s4 1983009808
        %v949 = vunpack.c.0.s8 %v948
        %v950 = vlaneseq
        %v951 = vshrl.u32 %v950, 7
        %v952 = vsub.s32 %v949, %v951
        %v953 = vrot.slane %v939, %v952
        %v954 = vcombine.high %v937, 0.0
        %v956 = vunpack.c.l.s4 1983009808
        %v957 = vunpack.c.0.s8 %v956
        %v958 = vlaneseq
        %v959 = vshrl.u32 %v958, 7
        %v960 = vsub.s32 %v957, %v959
        %v961 = vrot.slane %v937, %v960
        %v963 = vunpack.c.l.s4 1983009808
        %v964 = vunpack.c.0.s8 %v963
        %v965 = vlaneseq
        %v966 = vshrl.u32 %v965, 7
        %v967 = vsub.s32 %v964, %v966
        %v968 = vrot.slane %v954, %v967
        %v969 = vcombine.low %v946, %v961
        %v970 = vcombine.high %v946, %v961
        %v972 = vunpack.c.l.s4 1934713408
        %v973 = vunpack.c.0.s8 %v972
        %v974 = vlaneseq
        %v975 = vshrl.u32 %v974, 7
        %v976 = vsub.s32 %v973, %v975
        %v977 = vrot.slane %v969, %v976
        %v979 = vunpack.c.l.s4 1934713408
        %v980 = vunpack.c.0.s8 %v979
        %v981 = vlaneseq
        %v982 = vshrl.u32 %v981, 7
        %v983 = vsub.s32 %v980, %v982
        %v984 = vrot.slane %v970, %v983
        %v985 = vcombine.low %v953, %v968
        %v986 = vcombine.high %v953, %v968
        %v988 = vunpack.c.l.s4 1934713408
        %v989 = vunpack.c.0.s8 %v988
        %v990 = vlaneseq
        %v991 = vshrl.u32 %v990, 7
        %v992 = vsub.s32 %v989, %v991
        %v993 = vrot.slane %v985, %v992
        %v995 = vunpack.c.l.s4 1934713408
        %v996 = vunpack.c.0.s8 %v995
        %v997 = vlaneseq
        %v998 = vshrl.u32 %v997, 7
        %v999 = vsub.s32 %v996, %v998
        %v1000 = vrot.slane %v986, %v999
        %v1001 = vcombine.high %v977, 0.0
        %v1002 = vcombine.high %v984, 0.0
        %v1003 = vcombine.high %v993, 0.0
        %v1004 = vcombine.high %v1000, 0.0
        %1006 = vrot.lane.b32.xlu0 %v860, 112
        %v1007 = vpop.permute.xlu0 %1006
        %v1009 = vcombine.high %v860, 0.0
        %v1011 = vunpack.c.l.s4 1983009808
        %v1012 = vunpack.c.0.s8 %v1011
        %v1013 = vlaneseq
        %v1014 = vshrl.u32 %v1013, 7
        %v1015 = vsub.s32 %v1012, %v1014
        %v1016 = vrot.slane %v860, %v1015
        %v1018 = vunpack.c.l.s4 1983009808
        %v1019 = vunpack.c.0.s8 %v1018
        %v1020 = vlaneseq
        %v1021 = vshrl.u32 %v1020, 7
        %v1022 = vsub.s32 %v1019, %v1021
        %v1023 = vrot.slane %v1009, %v1022
        %v1024 = vcombine.high %v1007, 0.0
        %v1026 = vunpack.c.l.s4 1983009808
        %v1027 = vunpack.c.0.s8 %v1026
        %v1028 = vlaneseq
        %v1029 = vshrl.u32 %v1028, 7
        %v1030 = vsub.s32 %v1027, %v1029
        %v1031 = vrot.slane %v1007, %v1030
        %v1033 = vunpack.c.l.s4 1983009808
        %v1034 = vunpack.c.0.s8 %v1033
        %v1035 = vlaneseq
        %v1036 = vshrl.u32 %v1035, 7
        %v1037 = vsub.s32 %v1034, %v1036
        %v1038 = vrot.slane %v1024, %v1037
        %v1039 = vcombine.low %v1016, %v1031
        %v1040 = vcombine.high %v1016, %v1031
        %v1042 = vunpack.c.l.s4 1934713408
        %v1043 = vunpack.c.0.s8 %v1042
        %v1044 = vlaneseq
        %v1045 = vshrl.u32 %v1044, 7
        %v1046 = vsub.s32 %v1043, %v1045
        %v1047 = vrot.slane %v1039, %v1046
        %v1049 = vunpack.c.l.s4 1934713408
        %v1050 = vunpack.c.0.s8 %v1049
        %v1051 = vlaneseq
        %v1052 = vshrl.u32 %v1051, 7
        %v1053 = vsub.s32 %v1050, %v1052
        %v1054 = vrot.slane %v1040, %v1053
        %v1055 = vcombine.low %v1023, %v1038
        %v1056 = vcombine.high %v1023, %v1038
        %v1058 = vunpack.c.l.s4 1934713408
        %v1059 = vunpack.c.0.s8 %v1058
        %v1060 = vlaneseq
        %v1061 = vshrl.u32 %v1060, 7
        %v1062 = vsub.s32 %v1059, %v1061
        %v1063 = vrot.slane %v1055, %v1062
        %v1065 = vunpack.c.l.s4 1934713408
        %v1066 = vunpack.c.0.s8 %v1065
        %v1067 = vlaneseq
        %v1068 = vshrl.u32 %v1067, 7
        %v1069 = vsub.s32 %v1066, %v1068
        %v1070 = vrot.slane %v1056, %v1069
        %v1071 = vcombine.high %v1047, 0.0
        %v1072 = vcombine.high %v1054, 0.0
        %v1073 = vcombine.high %v1063, 0.0
        %v1074 = vcombine.high %v1070, 0.0
        %v1075 = vsub.f32 0.0, %v907
        %v1076 = vsub.f32 0.0, %v931
        %v1077 = vsub.f32 0.0, %v914
        %v1078 = vsub.f32 0.0, %v932
        %v1079 = vsub.f32 0.0, %v923
        %v1080 = vsub.f32 0.0, %v933
        %v1081 = vsub.f32 0.0, %v930
        %v1082 = vsub.f32 0.0, %v934
        %1091 = vrot.lane.b32.xlu0 %v1075, 120
        %v1092 = vpop.permute.xlu0 %1091
        %1093 = vrot.lane.b32.xlu0 %v1076, 120
        %v1094 = vpop.permute.xlu0 %1093
        %1095 = vrot.lane.b32.xlu0 %v1077, 120
        %v1096 = vpop.permute.xlu0 %1095
        %1097 = vrot.lane.b32.xlu0 %v1078, 120
        %v1098 = vpop.permute.xlu0 %1097
        %1099 = vrot.lane.b32.xlu0 %v1079, 120
        %v1100 = vpop.permute.xlu0 %1099
        %1101 = vrot.lane.b32.xlu0 %v1080, 120
        %v1102 = vpop.permute.xlu0 %1101
        %1103 = vrot.lane.b32.xlu0 %v1081, 120
        %v1104 = vpop.permute.xlu0 %1103
        %1105 = vrot.lane.b32.xlu0 %v1082, 120
        %v1106 = vpop.permute.xlu0 %1105
        %1123 = vrot.lane.b32.xlu0 %v907, 8
        %v1124 = vpop.permute.xlu0 %1123
        %1125 = vrot.lane.b32.xlu0 %v931, 8
        %v1126 = vpop.permute.xlu0 %1125
        %1127 = vrot.lane.b32.xlu0 %v914, 8
        %v1128 = vpop.permute.xlu0 %1127
        %1129 = vrot.lane.b32.xlu0 %v932, 8
        %v1130 = vpop.permute.xlu0 %1129
        %1131 = vrot.lane.b32.xlu0 %v923, 8
        %v1132 = vpop.permute.xlu0 %1131
        %1133 = vrot.lane.b32.xlu0 %v933, 8
        %v1134 = vpop.permute.xlu0 %1133
        %1135 = vrot.lane.b32.xlu0 %v930, 8
        %v1136 = vpop.permute.xlu0 %1135
        %1137 = vrot.lane.b32.xlu0 %v934, 8
        %v1138 = vpop.permute.xlu0 %1137
        %vm1147 = vcmask 64512
        %v1148 = vsel %vm1147, %v1092, %v1124
        %v1149 = vsel %vm1147, %v1094, %v1126
        %v1150 = vsel %vm1147, %v1096, %v1128
        %v1151 = vsel %vm1147, %v1098, %v1130
        %v1152 = vsel %vm1147, %v1100, %v1132
        %v1153 = vsel %vm1147, %v1102, %v1134
        %v1154 = vsel %vm1147, %v1104, %v1136
        %v1155 = vsel %vm1147, %v1106, %v1138
        %v1156 = vlaneseq
        %v1157 = vshrl.u32 %v1156, 7
        %v1158 = vsub.s32 0, %v1157
        %v1159 = vrot.slane %v598, %v1158
        %v1160 = vlaneseq
        %v1161 = vshrl.u32 %v1160, 7
        %v1162 = vsub.s32 0, %v1161
        %v1163 = vrot.slane %v612, %v1162
        %v1164 = vlaneseq
        %v1165 = vshrl.u32 %v1164, 7
        %v1166 = vsub.s32 0, %v1165
        %v1167 = vrot.slane %v620, %v1166
        %v1168 = vlaneseq
        %v1169 = vshrl.u32 %v1168, 7
        %v1170 = vsub.s32 0, %v1169
        %v1171 = vrot.slane %v622, %v1170
        %v1172 = vlaneseq
        %v1173 = vshrl.u32 %v1172, 7
        %v1174 = vsub.s32 0, %v1173
        %v1175 = vrot.slane %v605, %v1174
        %v1176 = vlaneseq
        %v1177 = vshrl.u32 %v1176, 7
        %v1178 = vsub.s32 0, %v1177
        %v1179 = vrot.slane %v619, %v1178
        %v1180 = vlaneseq
        %v1181 = vshrl.u32 %v1180, 7
        %v1182 = vsub.s32 0, %v1181
        %v1183 = vrot.slane %v621, %v1182
        %v1184 = vlaneseq
        %v1185 = vshrl.u32 %v1184, 7
        %v1186 = vsub.s32 0, %v1185
        %v1187 = vrot.slane %v623, %v1186
        %v1196 = vmul.f32 %v907, %v1159
        %v1197 = vmul.f32 %v931, %v1163
        %v1198 = vmul.f32 %v914, %v1167
        %v1199 = vmul.f32 %v932, %v1171
        %v1200 = vmul.f32 %v923, %v1175
        %v1201 = vmul.f32 %v933, %v1179
        %v1202 = vmul.f32 %v930, %v1183
        %v1203 = vmul.f32 %v934, %v1187
        %v1204 = vlaneseq
        %v1205 = vshrl.u32 %v1204, 7
        %v1206 = vsub.s32 0, %v1205
        %v1207 = vrot.slane %v649, %v1206
        %v1208 = vlaneseq
        %v1209 = vshrl.u32 %v1208, 7
        %v1210 = vsub.s32 0, %v1209
        %v1211 = vrot.slane %v663, %v1210
        %v1212 = vlaneseq
        %v1213 = vshrl.u32 %v1212, 7
        %v1214 = vsub.s32 0, %v1213
        %v1215 = vrot.slane %v671, %v1214
        %v1216 = vlaneseq
        %v1217 = vshrl.u32 %v1216, 7
        %v1218 = vsub.s32 0, %v1217
        %v1219 = vrot.slane %v673, %v1218
        %v1220 = vlaneseq
        %v1221 = vshrl.u32 %v1220, 7
        %v1222 = vsub.s32 0, %v1221
        %v1223 = vrot.slane %v656, %v1222
        %v1224 = vlaneseq
        %v1225 = vshrl.u32 %v1224, 7
        %v1226 = vsub.s32 0, %v1225
        %v1227 = vrot.slane %v670, %v1226
        %v1228 = vlaneseq
        %v1229 = vshrl.u32 %v1228, 7
        %v1230 = vsub.s32 0, %v1229
        %v1231 = vrot.slane %v672, %v1230
        %v1232 = vlaneseq
        %v1233 = vshrl.u32 %v1232, 7
        %v1234 = vsub.s32 0, %v1233
        %v1235 = vrot.slane %v674, %v1234
        %v1244 = vmul.f32 %v1148, %v1207
        %v1245 = vmul.f32 %v1149, %v1211
        %v1246 = vmul.f32 %v1150, %v1215
        %v1247 = vmul.f32 %v1151, %v1219
        %v1248 = vmul.f32 %v1152, %v1223
        %v1249 = vmul.f32 %v1153, %v1227
        %v1250 = vmul.f32 %v1154, %v1231
        %v1251 = vmul.f32 %v1155, %v1235
        %v1252 = vadd.f32 %v1196, %v1244
        %v1253 = vadd.f32 %v1197, %v1245
        %v1254 = vadd.f32 %v1198, %v1246
        %v1255 = vadd.f32 %v1199, %v1247
        %v1256 = vadd.f32 %v1200, %v1248
        %v1257 = vadd.f32 %v1201, %v1249
        %v1258 = vadd.f32 %v1202, %v1250
        %v1259 = vadd.f32 %v1203, %v1251
        %v1260 = vpack.c.bf16 %v1252, %v1252
        %v1261 = vpack.c.bf16 %v1253, %v1253
        %v1262 = vpack.c.bf16 %v1254, %v1254
        %v1263 = vpack.c.bf16 %v1255, %v1255
        %v1264 = vpack.c.bf16 %v1256, %v1256
        %v1265 = vpack.c.bf16 %v1257, %v1257
        %v1266 = vpack.c.bf16 %v1258, %v1258
        %v1267 = vpack.c.bf16 %v1259, %v1259
        %v1268 = vcombine.low %v1260, %v1264
        %v1270 = vunpack.c.l.s4 1983009808
        %v1271 = vunpack.c.0.s8 %v1270
        %v1272 = vlaneseq
        %v1273 = vshrl.u32 %v1272, 7
        %v1274 = vsub.s32 %v1271, %v1273
        %v1275 = vrot.slane %v1268, %v1274
        %v1276 = vcombine.low %v1262, %v1266
        %v1278 = vunpack.c.l.s4 1983009808
        %v1279 = vunpack.c.0.s8 %v1278
        %v1280 = vlaneseq
        %v1281 = vshrl.u32 %v1280, 7
        %v1282 = vsub.s32 %v1279, %v1281
        %v1283 = vrot.slane %v1276, %v1282
        %v1284 = vcombine.low %v1275, %v1283
        %v1286 = vunpack.c.l.s4 1934713408
        %v1287 = vunpack.c.0.s8 %v1286
        %v1288 = vlaneseq
        %v1289 = vshrl.u32 %v1288, 7
        %v1290 = vsub.s32 %v1287, %v1289
        %v1291 = vrot.slane %v1284, %v1290
        %v1292 = vcombine.low %v1261, %v1265
        %v1294 = vunpack.c.l.s4 1983009808
        %v1295 = vunpack.c.0.s8 %v1294
        %v1296 = vlaneseq
        %v1297 = vshrl.u32 %v1296, 7
        %v1298 = vsub.s32 %v1295, %v1297
        %v1299 = vrot.slane %v1292, %v1298
        %v1300 = vcombine.low %v1263, %v1267
        %v1302 = vunpack.c.l.s4 1983009808
        %v1303 = vunpack.c.0.s8 %v1302
        %v1304 = vlaneseq
        %v1305 = vshrl.u32 %v1304, 7
        %v1306 = vsub.s32 %v1303, %v1305
        %v1307 = vrot.slane %v1300, %v1306
        %v1308 = vcombine.low %v1299, %v1307
        %v1310 = vunpack.c.l.s4 1934713408
        %v1311 = vunpack.c.0.s8 %v1310
        %v1312 = vlaneseq
        %v1313 = vshrl.u32 %v1312, 7
        %v1314 = vsub.s32 %v1311, %v1313
        %v1315 = vrot.slane %v1308, %v1314
        %v1318 = vpack.i.b16 %v1315, %v1291
        %v1319 = vshrl.u32 %v1291, 16
        %v1320 = vshrl.u32 %v1315, 16
        %v1321 = vpack.i.b16 %v1320, %v1319
        %v1322 = vsub.f32 0.0, %v977
        %v1323 = vsub.f32 0.0, %v1001
        %v1324 = vsub.f32 0.0, %v984
        %v1325 = vsub.f32 0.0, %v1002
        %v1326 = vsub.f32 0.0, %v993
        %v1327 = vsub.f32 0.0, %v1003
        %v1328 = vsub.f32 0.0, %v1000
        %v1329 = vsub.f32 0.0, %v1004
        %1338 = vrot.lane.b32.xlu0 %v1322, 120
        %v1339 = vpop.permute.xlu0 %1338
        %1340 = vrot.lane.b32.xlu0 %v1323, 120
        %v1341 = vpop.permute.xlu0 %1340
        %1342 = vrot.lane.b32.xlu0 %v1324, 120
        %v1343 = vpop.permute.xlu0 %1342
        %1344 = vrot.lane.b32.xlu0 %v1325, 120
        %v1345 = vpop.permute.xlu0 %1344
        %1346 = vrot.lane.b32.xlu0 %v1326, 120
        %v1347 = vpop.permute.xlu0 %1346
        %1348 = vrot.lane.b32.xlu0 %v1327, 120
        %v1349 = vpop.permute.xlu0 %1348
        %1350 = vrot.lane.b32.xlu0 %v1328, 120
        %v1351 = vpop.permute.xlu0 %1350
        %1352 = vrot.lane.b32.xlu0 %v1329, 120
        %v1353 = vpop.permute.xlu0 %1352
        %1370 = vrot.lane.b32.xlu0 %v977, 8
        %v1371 = vpop.permute.xlu0 %1370
        %1372 = vrot.lane.b32.xlu0 %v1001, 8
        %v1373 = vpop.permute.xlu0 %1372
        %1374 = vrot.lane.b32.xlu0 %v984, 8
        %v1375 = vpop.permute.xlu0 %1374
        %1376 = vrot.lane.b32.xlu0 %v1002, 8
        %v1377 = vpop.permute.xlu0 %1376
        %1378 = vrot.lane.b32.xlu0 %v993, 8
        %v1379 = vpop.permute.xlu0 %1378
        %1380 = vrot.lane.b32.xlu0 %v1003, 8
        %v1381 = vpop.permute.xlu0 %1380
        %1382 = vrot.lane.b32.xlu0 %v1000, 8
        %v1383 = vpop.permute.xlu0 %1382
        %1384 = vrot.lane.b32.xlu0 %v1004, 8
        %v1385 = vpop.permute.xlu0 %1384
        %v1394 = vsel %vm1147, %v1339, %v1371
        %v1395 = vsel %vm1147, %v1341, %v1373
        %v1396 = vsel %vm1147, %v1343, %v1375
        %v1397 = vsel %vm1147, %v1345, %v1377
        %v1398 = vsel %vm1147, %v1347, %v1379
        %v1399 = vsel %vm1147, %v1349, %v1381
        %v1400 = vsel %vm1147, %v1351, %v1383
        %v1401 = vsel %vm1147, %v1353, %v1385
        %v1402 = vmul.f32 %v977, %v1159
        %v1403 = vmul.f32 %v1001, %v1163
        %v1404 = vmul.f32 %v984, %v1167
        %v1405 = vmul.f32 %v1002, %v1171
        %v1406 = vmul.f32 %v993, %v1175
        %v1407 = vmul.f32 %v1003, %v1179
        %v1408 = vmul.f32 %v1000, %v1183
        %v1409 = vmul.f32 %v1004, %v1187
        %v1410 = vmul.f32 %v1394, %v1207
        %v1411 = vmul.f32 %v1395, %v1211
        %v1412 = vmul.f32 %v1396, %v1215
        %v1413 = vmul.f32 %v1397, %v1219
        %v1414 = vmul.f32 %v1398, %v1223
        %v1415 = vmul.f32 %v1399, %v1227
        %v1416 = vmul.f32 %v1400, %v1231
        %v1417 = vmul.f32 %v1401, %v1235
        %v1418 = vadd.f32 %v1402, %v1410
        %v1419 = vadd.f32 %v1403, %v1411
        %v1420 = vadd.f32 %v1404, %v1412
        %v1421 = vadd.f32 %v1405, %v1413
        %v1422 = vadd.f32 %v1406, %v1414
        %v1423 = vadd.f32 %v1407, %v1415
        %v1424 = vadd.f32 %v1408, %v1416
        %v1425 = vadd.f32 %v1409, %v1417
        %v1426 = vpack.c.bf16 %v1418, %v1418
        %v1427 = vpack.c.bf16 %v1419, %v1419
        %v1428 = vpack.c.bf16 %v1420, %v1420
        %v1429 = vpack.c.bf16 %v1421, %v1421
        %v1430 = vpack.c.bf16 %v1422, %v1422
        %v1431 = vpack.c.bf16 %v1423, %v1423
        %v1432 = vpack.c.bf16 %v1424, %v1424
        %v1433 = vpack.c.bf16 %v1425, %v1425
        %v1434 = vcombine.low %v1426, %v1430
        %v1436 = vunpack.c.l.s4 1983009808
        %v1437 = vunpack.c.0.s8 %v1436
        %v1438 = vlaneseq
        %v1439 = vshrl.u32 %v1438, 7
        %v1440 = vsub.s32 %v1437, %v1439
        %v1441 = vrot.slane %v1434, %v1440
        %v1442 = vcombine.low %v1428, %v1432
        %v1444 = vunpack.c.l.s4 1983009808
        %v1445 = vunpack.c.0.s8 %v1444
        %v1446 = vlaneseq
        %v1447 = vshrl.u32 %v1446, 7
        %v1448 = vsub.s32 %v1445, %v1447
        %v1449 = vrot.slane %v1442, %v1448
        %v1450 = vcombine.low %v1441, %v1449
        %v1452 = vunpack.c.l.s4 1934713408
        %v1453 = vunpack.c.0.s8 %v1452
        %v1454 = vlaneseq
        %v1455 = vshrl.u32 %v1454, 7
        %v1456 = vsub.s32 %v1453, %v1455
        %v1457 = vrot.slane %v1450, %v1456
        %v1458 = vcombine.low %v1427, %v1431
        %v1460 = vunpack.c.l.s4 1983009808
        %v1461 = vunpack.c.0.s8 %v1460
        %v1462 = vlaneseq
        %v1463 = vshrl.u32 %v1462, 7
        %v1464 = vsub.s32 %v1461, %v1463
        %v1465 = vrot.slane %v1458, %v1464
        %v1466 = vcombine.low %v1429, %v1433
        %v1468 = vunpack.c.l.s4 1983009808
        %v1469 = vunpack.c.0.s8 %v1468
        %v1470 = vlaneseq
        %v1471 = vshrl.u32 %v1470, 7
        %v1472 = vsub.s32 %v1469, %v1471
        %v1473 = vrot.slane %v1466, %v1472
        %v1474 = vcombine.low %v1465, %v1473
        %v1476 = vunpack.c.l.s4 1934713408
        %v1477 = vunpack.c.0.s8 %v1476
        %v1478 = vlaneseq
        %v1479 = vshrl.u32 %v1478, 7
        %v1480 = vsub.s32 %v1477, %v1479
        %v1481 = vrot.slane %v1474, %v1480
        %v1484 = vpack.i.b16 %v1481, %v1457
        %v1485 = vshrl.u32 %v1457, 16
        %v1486 = vshrl.u32 %v1481, 16
        %v1487 = vpack.i.b16 %v1486, %v1485
        %v1488 = vpack.c.bf16 %v1047, %v1047
        %v1489 = vpack.c.bf16 %v1071, %v1071
        %v1490 = vpack.c.bf16 %v1054, %v1054
        %v1491 = vpack.c.bf16 %v1072, %v1072
        %v1492 = vpack.c.bf16 %v1063, %v1063
        %v1493 = vpack.c.bf16 %v1073, %v1073
        %v1494 = vpack.c.bf16 %v1070, %v1070
        %v1495 = vpack.c.bf16 %v1074, %v1074
        %v1496 = vcombine.low %v1488, %v1492
        %v1498 = vunpack.c.l.s4 1983009808
        %v1499 = vunpack.c.0.s8 %v1498
        %v1500 = vlaneseq
        %v1501 = vshrl.u32 %v1500, 7
        %v1502 = vsub.s32 %v1499, %v1501
        %v1503 = vrot.slane %v1496, %v1502
        %v1504 = vcombine.low %v1490, %v1494
        %v1506 = vunpack.c.l.s4 1983009808
        %v1507 = vunpack.c.0.s8 %v1506
        %v1508 = vlaneseq
        %v1509 = vshrl.u32 %v1508, 7
        %v1510 = vsub.s32 %v1507, %v1509
        %v1511 = vrot.slane %v1504, %v1510
        %v1512 = vcombine.low %v1503, %v1511
        %v1514 = vunpack.c.l.s4 1934713408
        %v1515 = vunpack.c.0.s8 %v1514
        %v1516 = vlaneseq
        %v1517 = vshrl.u32 %v1516, 7
        %v1518 = vsub.s32 %v1515, %v1517
        %v1519 = vrot.slane %v1512, %v1518
        %v1520 = vcombine.low %v1489, %v1493
        %v1522 = vunpack.c.l.s4 1983009808
        %v1523 = vunpack.c.0.s8 %v1522
        %v1524 = vlaneseq
        %v1525 = vshrl.u32 %v1524, 7
        %v1526 = vsub.s32 %v1523, %v1525
        %v1527 = vrot.slane %v1520, %v1526
        %v1528 = vcombine.low %v1491, %v1495
        %v1530 = vunpack.c.l.s4 1983009808
        %v1531 = vunpack.c.0.s8 %v1530
        %v1532 = vlaneseq
        %v1533 = vshrl.u32 %v1532, 7
        %v1534 = vsub.s32 %v1531, %v1533
        %v1535 = vrot.slane %v1528, %v1534
        %v1536 = vcombine.low %v1527, %v1535
        %v1538 = vunpack.c.l.s4 1934713408
        %v1539 = vunpack.c.0.s8 %v1538
        %v1540 = vlaneseq
        %v1541 = vshrl.u32 %v1540, 7
        %v1542 = vsub.s32 %v1539, %v1541
        %v1543 = vrot.slane %v1536, %v1542
        %v1546 = vpack.i.b16 %v1543, %v1519
        %v1547 = vshrl.u32 %v1519, 16
        %v1548 = vshrl.u32 %v1543, 16
        %v1549 = vpack.i.b16 %v1548, %v1547
        %v1550 = vld [vmem:[%s570] sm:$0x1]
        %vm1551 = vcmp.gt.f32.partialorder %v1550, 0.0
        %v1552 = vlaneseq
        %v1553 = vshrl.u32 %v1552, 7
        %v1554 = vlaneseq
        %v1555 = vand.u32 %v1554, 127
        %vm1556 = vcmp.le.s32.totalorder %v1555, %v1553
        %v1557 = vsel %vm1551, 1, 0
        %v1558 = vlaneseq
        %v1559 = vshrl.u32 %v1558, 7
        %v1560 = vsub.s32 0, %v1559
        %v1561 = vrot.slane %v1557, %v1560
        %vm1562 = vcmp.eq.s32.totalorder %v1561, 1
        %vm1563 = vmand %vm1556, %vm1562
        %vm1564 = vcmask 130048
        %v1566 = vsel %vm1564, %v1318, 0
        %v1569 = vsel %vm1564, %v1484, 0
        %1571 = vmatprep.subr.bf16.mxu0 0
        %1572 = vmatpush1.bf16.xpose.msra.mxu0 %v1569
        %1573 = vmatprep.subr.bf16.mxu0 0
        %1574 = vmatpush1.bf16.xpose.msra.mxu0 0
        %1575 = vmatprep.subr.bf16.mxu0 0
        %1576 = vmatpush1.bf16.xpose.msra.mxu0 0
        %1577 = vmatprep.subr.bf16.mxu0 0
        %1578 = vmatpush1.bf16.xpose.msra.mxu0 0
        %1579 = vmatprep.subr.bf16.mxu0 0
        %1580 = vmatpush1.bf16.xpose.msra.mxu0 0
        %1581 = vmatprep.subr.bf16.mxu0 0
        %1582 = vmatpush1.bf16.xpose.msra.mxu0 0
        %1583 = vmatprep.subr.bf16.mxu0 0
        %1584 = vmatpush1.bf16.xpose.msra.mxu0 0
        %1585 = vmatprep.subr.bf16.mxu0 0
        %1586 = vmatpush1.bf16.xpose.msra.mxu0 0
        %1587 = vmatprep.subr.bf16.mxu0 0
        %1588 = vmatpush1.bf16.xpose.msra.mxu0 0
        %1589 = vmatprep.subr.bf16.mxu0 0
        %1590 = vmatpush1.bf16.xpose.msra.mxu0 0
        %1591 = vmatprep.subr.bf16.mxu0 0
        %1592 = vmatpush1.bf16.xpose.msra.mxu0 0
        %1593 = vmatprep.subr.bf16.mxu0 0
        %1594 = vmatpush1.bf16.xpose.msra.mxu0 0
        %1595 = vmatprep.subr.bf16.mxu0 0
        %1596 = vmatpush1.bf16.xpose.msra.mxu0 0
        %1597 = vmatprep.subr.bf16.mxu0 0
        %1598 = vmatpush1.bf16.xpose.msra.mxu0 0
        %1599 = vmatprep.subr.bf16.mxu0 0
        %1600 = vmatpush1.bf16.xpose.msra.mxu0 0
        %1601 = vmatprep.subr.bf16.mxu0 0
        %1602 = vmatpush1.bf16.xpose.msra.mxu0 0
        %1603 = vmatprep.mubr.bf16.mxu0 0
        %1604 = vmatmul.mubr.bf16.gmra.mrb[0].mxu0 %v1566
        %v1605 = vpop.f32.mrb[0].mxu0
        %v1606 = vadd.f32 0.0, %v1605
        %v1607 = vpop.f32.mrb[0].mxu0
        %v1608 = vpop.f32.mrb[0].mxu0
        %v1609 = vpop.f32.mrb[0].mxu0
        %1610 = vdwg.mxu0
        %v1612 = vsel %vm1564, %v1321, 0
        %v1615 = vsel %vm1564, %v1487, 0
        %1617 = vmatprep.subr.bf16.mxu0 0
        %1618 = vmatpush1.bf16.xpose.msra.mxu0 %v1615
        %1619 = vmatprep.subr.bf16.mxu0 0
        %1620 = vmatpush1.bf16.xpose.msra.mxu0 0
        %1621 = vmatprep.subr.bf16.mxu0 0
        %1622 = vmatpush1.bf16.xpose.msra.mxu0 0
        %1623 = vmatprep.subr.bf16.mxu0 0
        %1624 = vmatpush1.bf16.xpose.msra.mxu0 0
        %1625 = vmatprep.subr.bf16.mxu0 0
        %1626 = vmatpush1.bf16.xpose.msra.mxu0 0
        %1627 = vmatprep.subr.bf16.mxu0 0
        %1628 = vmatpush1.bf16.xpose.msra.mxu0 0
        %1629 = vmatprep.subr.bf16.mxu0 0
        %1630 = vmatpush1.bf16.xpose.msra.mxu0 0
        %1631 = vmatprep.subr.bf16.mxu0 0
        %1632 = vmatpush1.bf16.xpose.msra.mxu0 0
        %1633 = vmatprep.subr.bf16.mxu0 0
        %1634 = vmatpush1.bf16.xpose.msra.mxu0 0
        %1635 = vmatprep.subr.bf16.mxu0 0
        %1636 = vmatpush1.bf16.xpose.msra.mxu0 0
        %1637 = vmatprep.subr.bf16.mxu0 0
        %1638 = vmatpush1.bf16.xpose.msra.mxu0 0
        %1639 = vmatprep.subr.bf16.mxu0 0
        %1640 = vmatpush1.bf16.xpose.msra.mxu0 0
        %1641 = vmatprep.subr.bf16.mxu0 0
        %1642 = vmatpush1.bf16.xpose.msra.mxu0 0
        %1643 = vmatprep.subr.bf16.mxu0 0
        %1644 = vmatpush1.bf16.xpose.msra.mxu0 0
        %1645 = vmatprep.subr.bf16.mxu0 0
        %1646 = vmatpush1.bf16.xpose.msra.mxu0 0
        %1647 = vmatprep.subr.bf16.mxu0 0
        %1648 = vmatpush1.bf16.xpose.msra.mxu0 0
        %1649 = vmatprep.mubr.bf16.mxu0 0
        %1650 = vmatmul.mubr.bf16.gmra.mrb[0].mxu0 %v1612
        %v1651 = vpop.f32.mrb[0].mxu0
        %v1652 = vadd.f32 0.0, %v1651
        %v1653 = vpop.f32.mrb[0].mxu0
        %v1654 = vpop.f32.mrb[0].mxu0
        %v1655 = vpop.f32.mrb[0].mxu0
        %1656 = vdwg.mxu0
        %v1657 = vmul.f32 %v1606, 0.25
        %v1658 = vmul.f32 %v1652, 0.25
        %v1659 = vsel %vm1563, 1, 0
        %vm1660 = vcmp.eq.s32.totalorder %v1659, 1
        %v1661 = vsel %vm1660, %v1657, -1e+09
        %v1662 = vsel %vm1660, %v1658, -1e+09
        %v1663 = vsel %vm1147, %v1661, -inf
        %1664 = vmax.xlane.f32.xlu0 %v1663
        %v1665 = vpop.xlane.xlu0 %1664
        %v1666 = vsel %vm1147, %v1662, -inf
        %1667 = vmax.xlane.f32.xlu0 %v1666
        %v1668 = vpop.xlane.xlu0 %1667
        %v1669 = vsub.f32 %v1661, %v1665
        %v1670 = vsub.f32 %v1662, %v1668
        %v1671 = vmul.f32 %v1669, 1.442695
        %v1672 = vpow.pop %v1671
        %v1673 = vmul.f32 %v1670, 1.442695
        %v1674 = vpow.pop %v1673
        %v1675 = vsel %vm1147, %v1672, 0.0
        %1676 = vadd.xlane.f32.xlu0 %v1675
        %v1677 = vpop.xlane.xlu0 %1676
        %v1678 = vsel %vm1147, %v1674, 0.0
        %1679 = vadd.xlane.f32.xlu0 %v1678
        %v1680 = vpop.xlane.xlu0 %1679
        %v1681 = vrcp.pop %v1677
        %v1682 = vrcp.pop %v1680
        %v1683 = vmul.f32 %v1672, %v1681
        %v1684 = vmul.f32 %v1674, %v1682
        %v1685 = vpack.c.bf16 %v1683, %v1683
        %v1686 = vpack.c.bf16 %v1684, %v1684
        %v1688 = vsel %vm1147, %v1685, 0
        %vm1690 = vcmask 1043456
        %v1692 = vsel %vm1690, %v1546, 0
        %1694 = vmatprep.subr.bf16.mxu0 0
        %1695 = vmatpush1.bf16.msra.mxu0 %v1692
        %1696 = vmatprep.subr.bf16.mxu0 0
        %1697 = vmatpush1.bf16.msra.mxu0 0
        %1698 = vmatprep.subr.bf16.mxu0 0
        %1699 = vmatpush1.bf16.msra.mxu0 0
        %1700 = vmatprep.subr.bf16.mxu0 0
        %1701 = vmatpush1.bf16.msra.mxu0 0
        %1702 = vmatprep.subr.bf16.mxu0 0
        %1703 = vmatpush1.bf16.msra.mxu0 0
        %1704 = vmatprep.subr.bf16.mxu0 0
        %1705 = vmatpush1.bf16.msra.mxu0 0
        %1706 = vmatprep.subr.bf16.mxu0 0
        %1707 = vmatpush1.bf16.msra.mxu0 0
        %1708 = vmatprep.subr.bf16.mxu0 0
        %1709 = vmatpush1.bf16.msra.mxu0 0
        %1710 = vmatprep.subr.bf16.mxu0 0
        %1711 = vmatpush1.bf16.msra.mxu0 0
        %1712 = vmatprep.subr.bf16.mxu0 0
        %1713 = vmatpush1.bf16.msra.mxu0 0
        %1714 = vmatprep.subr.bf16.mxu0 0
        %1715 = vmatpush1.bf16.msra.mxu0 0
        %1716 = vmatprep.subr.bf16.mxu0 0
        %1717 = vmatpush1.bf16.msra.mxu0 0
        %1718 = vmatprep.subr.bf16.mxu0 0
        %1719 = vmatpush1.bf16.msra.mxu0 0
        %1720 = vmatprep.subr.bf16.mxu0 0
        %1721 = vmatpush1.bf16.msra.mxu0 0
        %1722 = vmatprep.subr.bf16.mxu0 0
        %1723 = vmatpush1.bf16.msra.mxu0 0
        %1724 = vmatprep.subr.bf16.mxu0 0
        %1725 = vmatpush1.bf16.msra.mxu0 0
        %1726 = vmatprep.mubr.bf16.mxu0 0
        %1727 = vmatmul.mubr.bf16.gmra.mrb[0].mxu0 %v1688
        %v1728 = vpop.f32.mrb[0].mxu0
        %v1729 = vadd.f32 0.0, %v1728
        %v1730 = vpop.f32.mrb[0].mxu0
        %v1731 = vpop.f32.mrb[0].mxu0
        %v1732 = vpop.f32.mrb[0].mxu0
        %1733 = vdwg.mxu0
        %v1735 = vsel %vm1147, %v1686, 0
        %v1738 = vsel %vm1690, %v1549, 0
        %1740 = vmatprep.subr.bf16.mxu0 0
        %1741 = vmatpush1.bf16.msra.mxu0 %v1738
        %1742 = vmatprep.subr.bf16.mxu0 0
        %1743 = vmatpush1.bf16.msra.mxu0 0
        %1744 = vmatprep.subr.bf16.mxu0 0
        %1745 = vmatpush1.bf16.msra.mxu0 0
        %1746 = vmatprep.subr.bf16.mxu0 0
        %1747 = vmatpush1.bf16.msra.mxu0 0
        %1748 = vmatprep.subr.bf16.mxu0 0
        %1749 = vmatpush1.bf16.msra.mxu0 0
        %1750 = vmatprep.subr.bf16.mxu0 0
        %1751 = vmatpush1.bf16.msra.mxu0 0
        %1752 = vmatprep.subr.bf16.mxu0 0
        %1753 = vmatpush1.bf16.msra.mxu0 0
        %1754 = vmatprep.subr.bf16.mxu0 0
        %1755 = vmatpush1.bf16.msra.mxu0 0
        %1756 = vmatprep.subr.bf16.mxu0 0
        %1757 = vmatpush1.bf16.msra.mxu0 0
        %1758 = vmatprep.subr.bf16.mxu0 0
        %1759 = vmatpush1.bf16.msra.mxu0 0
        %1760 = vmatprep.subr.bf16.mxu0 0
        %1761 = vmatpush1.bf16.msra.mxu0 0
        %1762 = vmatprep.subr.bf16.mxu0 0
        %1763 = vmatpush1.bf16.msra.mxu0 0
        %1764 = vmatprep.subr.bf16.mxu0 0
        %1765 = vmatpush1.bf16.msra.mxu0 0
        %1766 = vmatprep.subr.bf16.mxu0 0
        %1767 = vmatpush1.bf16.msra.mxu0 0
        %1768 = vmatprep.subr.bf16.mxu0 0
        %1769 = vmatpush1.bf16.msra.mxu0 0
        %1770 = vmatprep.subr.bf16.mxu0 0
        %1771 = vmatpush1.bf16.msra.mxu0 0
        %1772 = vmatprep.mubr.bf16.mxu0 0
        %1773 = vmatmul.mubr.bf16.gmra.mrb[0].mxu0 %v1735
        %v1774 = vpop.f32.mrb[0].mxu0
        %v1775 = vadd.f32 0.0, %v1774
        %v1776 = vpop.f32.mrb[0].mxu0
        %v1777 = vpop.f32.mrb[0].mxu0
        %v1778 = vpop.f32.mrb[0].mxu0
        %1779 = vdwg.mxu0
        %v1780 = vcombine.high %v1729, 0.0
        %v1782 = vunpack.c.l.s4 1983009808
        %v1783 = vunpack.c.0.s8 %v1782
        %v1784 = vlaneseq
        %v1785 = vshrl.u32 %v1784, 7
        %v1786 = vsub.s32 %v1783, %v1785
        %v1787 = vrot.slane %v1729, %v1786
        %v1789 = vunpack.c.l.s4 1983009808
        %v1790 = vunpack.c.0.s8 %v1789
        %v1791 = vlaneseq
        %v1792 = vshrl.u32 %v1791, 7
        %v1793 = vsub.s32 %v1790, %v1792
        %v1794 = vrot.slane %v1780, %v1793
        %v1795 = vcombine.high %v1775, 0.0
        %v1797 = vunpack.c.l.s4 1983009808
        %v1798 = vunpack.c.0.s8 %v1797
        %v1799 = vlaneseq
        %v1800 = vshrl.u32 %v1799, 7
        %v1801 = vsub.s32 %v1798, %v1800
        %v1802 = vrot.slane %v1775, %v1801
        %v1804 = vunpack.c.l.s4 1983009808
        %v1805 = vunpack.c.0.s8 %v1804
        %v1806 = vlaneseq
        %v1807 = vshrl.u32 %v1806, 7
        %v1808 = vsub.s32 %v1805, %v1807
        %v1809 = vrot.slane %v1795, %v1808
        %v1810 = vcombine.low %v1787, %v1802
        %v1811 = vcombine.high %v1787, %v1802
        %v1813 = vunpack.c.l.s4 1934713408
        %v1814 = vunpack.c.0.s8 %v1813
        %v1815 = vlaneseq
        %v1816 = vshrl.u32 %v1815, 7
        %v1817 = vsub.s32 %v1814, %v1816
        %v1818 = vrot.slane %v1810, %v1817
        %v1820 = vunpack.c.l.s4 1934713408
        %v1821 = vunpack.c.0.s8 %v1820
        %v1822 = vlaneseq
        %v1823 = vshrl.u32 %v1822, 7
        %v1824 = vsub.s32 %v1821, %v1823
        %v1825 = vrot.slane %v1811, %v1824
        %v1826 = vcombine.low %v1794, %v1809
        %v1827 = vcombine.high %v1794, %v1809
        %v1829 = vunpack.c.l.s4 1934713408
        %v1830 = vunpack.c.0.s8 %v1829
        %v1831 = vlaneseq
        %v1832 = vshrl.u32 %v1831, 7
        %v1833 = vsub.s32 %v1830, %v1832
        %v1834 = vrot.slane %v1826, %v1833
        %v1836 = vunpack.c.l.s4 1934713408
        %v1837 = vunpack.c.0.s8 %v1836
        %v1838 = vlaneseq
        %v1839 = vshrl.u32 %v1838, 7
        %v1840 = vsub.s32 %v1837, %v1839
        %v1841 = vrot.slane %v1827, %v1840
        %v1842 = vcombine.high %v1818, 0.0
        %v1843 = vcombine.high %v1825, 0.0
        %v1844 = vcombine.high %v1834, 0.0
        %v1845 = vcombine.high %v1841, 0.0
        %v1846 = vcombine.low %v1818, %v1825
        %v1848 = vunpack.c.l.s4 1983009808
        %v1849 = vunpack.c.0.s8 %v1848
        %v1850 = vlaneseq
        %v1851 = vshrl.u32 %v1850, 7
        %v1852 = vsub.s32 %v1849, %v1851
        %v1853 = vrot.slane %v1846, %v1852
        %v1854 = vcombine.low %v1842, %v1843
        %v1856 = vunpack.c.l.s4 1983009808
        %v1857 = vunpack.c.0.s8 %v1856
        %v1858 = vlaneseq
        %v1859 = vshrl.u32 %v1858, 7
        %v1860 = vsub.s32 %v1857, %v1859
        %v1861 = vrot.slane %v1854, %v1860
        %v1862 = vcombine.low %v1834, %v1841
        %v1864 = vunpack.c.l.s4 1983009808
        %v1865 = vunpack.c.0.s8 %v1864
        %v1866 = vlaneseq
        %v1867 = vshrl.u32 %v1866, 7
        %v1868 = vsub.s32 %v1865, %v1867
        %v1869 = vrot.slane %v1862, %v1868
        %v1870 = vcombine.low %v1844, %v1845
        %v1872 = vunpack.c.l.s4 1983009808
        %v1873 = vunpack.c.0.s8 %v1872
        %v1874 = vlaneseq
        %v1875 = vshrl.u32 %v1874, 7
        %v1876 = vsub.s32 %v1873, %v1875
        %v1877 = vrot.slane %v1870, %v1876
        %v1878 = vcombine.low %v1853, %v1861
        %v1880 = vunpack.c.l.s4 1934713408
        %v1881 = vunpack.c.0.s8 %v1880
        %v1882 = vlaneseq
        %v1883 = vshrl.u32 %v1882, 7
        %v1884 = vsub.s32 %v1881, %v1883
        %v1885 = vrot.slane %v1878, %v1884
        %v1886 = vcombine.low %v1869, %v1877
        %v1888 = vunpack.c.l.s4 1934713408
        %v1889 = vunpack.c.0.s8 %v1888
        %v1890 = vlaneseq
        %v1891 = vshrl.u32 %v1890, 7
        %v1892 = vsub.s32 %v1889, %v1891
        %v1893 = vrot.slane %v1886, %v1892
        %v1894 = vcombine.low %v1885, %v1893
        %v1895 = vcombine.high %v1885, %v1893
        %1897 = vrot.lane.b32.xlu0 %v1895, 16
        %v1898 = vpop.permute.xlu0 %1897
        %v1900 = vsel %vm1564, %v1894, %v1898
        %v1901 = vpack.c.bf16 %v1900, %v1900
        %v1902 = vld [vmem:[#allocation10] sm:$0xf]
        %v1903 = vld [vmem:[#allocation10 + $0x4] sm:$0xf]
        %v1904 = vld [vmem:[#allocation10 + $0x8] sm:$0xf]
        %v1905 = vld [vmem:[#allocation10 + $0xc] sm:$0xf]
        %v1910 = vunpack.c.l.b16 %v1902
        %v1911 = vunpack.c.l.b16 %v1903
        %v1912 = vunpack.c.l.b16 %v1904
        %v1913 = vunpack.c.l.b16 %v1905
        %v1914 = vpack.c.b16 %v1911, %v1910
        %v1915 = vpack.c.b16 %v1913, %v1912
        %v1919 = vsel %vm677, %v1901, 0
        %1921 = vmatprep.subr.bf16.mxu0 0
        %1922 = vmatpush1.bf16.msra.mxu0 %v1914
        %1923 = vmatprep.subr.bf16.mxu0 0
        %1924 = vmatpush1.bf16.msra.mxu0 %v1915
        %1925 = vmatprep.subr.bf16.mxu0 0
        %1926 = vmatpush1.bf16.msra.mxu0 0
        %1927 = vmatprep.subr.bf16.mxu0 0
        %1928 = vmatpush1.bf16.msra.mxu0 0
        %1929 = vmatprep.subr.bf16.mxu0 0
        %1930 = vmatpush1.bf16.msra.mxu0 0
        %1931 = vmatprep.subr.bf16.mxu0 0
        %1932 = vmatpush1.bf16.msra.mxu0 0
        %1933 = vmatprep.subr.bf16.mxu0 0
        %1934 = vmatpush1.bf16.msra.mxu0 0
        %1935 = vmatprep.subr.bf16.mxu0 0
        %1936 = vmatpush1.bf16.msra.mxu0 0
        %1937 = vmatprep.subr.bf16.mxu0 0
        %1938 = vmatpush1.bf16.msra.mxu0 0
        %1939 = vmatprep.subr.bf16.mxu0 0
        %1940 = vmatpush1.bf16.msra.mxu0 0
        %1941 = vmatprep.subr.bf16.mxu0 0
        %1942 = vmatpush1.bf16.msra.mxu0 0
        %1943 = vmatprep.subr.bf16.mxu0 0
        %1944 = vmatpush1.bf16.msra.mxu0 0
        %1945 = vmatprep.subr.bf16.mxu0 0
        %1946 = vmatpush1.bf16.msra.mxu0 0
        %1947 = vmatprep.subr.bf16.mxu0 0
        %1948 = vmatpush1.bf16.msra.mxu0 0
        %1949 = vmatprep.subr.bf16.mxu0 0
        %1950 = vmatpush1.bf16.msra.mxu0 0
        %1951 = vmatprep.subr.bf16.mxu0 0
        %1952 = vmatpush1.bf16.msra.mxu0 0
        %1953 = vmatprep.mubr.bf16.mxu0 0
        %1954 = vmatmul.mubr.bf16.gmra.mrb[0].mxu0 %v1919
        %v1955 = vpop.f32.mrb[0].mxu0
        %v1956 = vadd.f32 0.0, %v1955
        %v1957 = vpop.f32.mrb[0].mxu0
        %v1958 = vpop.f32.mrb[0].mxu0
        %v1959 = vpop.f32.mrb[0].mxu0
        %1960 = vdwg.mxu0
        %v1961 = vadd.f32 %v572, %v1956
        %v1962 = vld [vmem:[#allocation11] sm:$0x1]
        %v1963 = vmul.f32 %v1961, %v1961
        %v1964 = vsel %vm677, %v1963, 0.0
        %1965 = vadd.xlane.f32.xlu0 %v1964
        %v1966 = vpop.xlane.xlu0 %1965
        %v1967 = vmul.f32 %v1966, %v681
        %v1968 = vadd.f32 %v1967, 1e-06
        %v1969 = vrsqrt.pop %v1968
        %v1970 = vmul.f32 %v1961, %v1969
        %v1972 = vlaneseq
        %v1973 = vshrl.u32 %v1972, 7
        %v1974 = vsub.s32 0, %v1973
        %v1975 = vrot.slane %v1962, %v1974
        %v1977 = vmul.f32 %v1970, %v1975
        %v1978 = vpack.c.bf16 %v1977, %v1977
        %v1979 = vld [vmem:[%s10] sm:$0xf]
        %v1980 = vld [vmem:[%s10 + $0x4] sm:$0xf]
        %v1981 = vld [vmem:[%s10 + $0x8] sm:$0xf]
        %v1982 = vld [vmem:[%s10 + $0xc] sm:$0xf]
        %v1987 = vunpack.c.l.b16 %v1979
        %v1988 = vunpack.c.l.b16 %v1980
        %v1989 = vunpack.c.l.b16 %v1981
        %v1990 = vunpack.c.l.b16 %v1982
        %v1991 = vpack.c.b16 %v1988, %v1987
        %v1992 = vpack.c.b16 %v1990, %v1989
        %v1996 = vsel %vm677, %v1978, 0
        %1998 = vmatprep.subr.bf16.mxu0 0
        %1999 = vmatpush1.bf16.msra.mxu0 %v1991
        %2000 = vmatprep.subr.bf16.mxu0 0
        %2001 = vmatpush1.bf16.msra.mxu0 %v1992
        %2002 = vmatprep.subr.bf16.mxu0 0
        %2003 = vmatpush1.bf16.msra.mxu0 0
        %2004 = vmatprep.subr.bf16.mxu0 0
        %2005 = vmatpush1.bf16.msra.mxu0 0
        %2006 = vmatprep.subr.bf16.mxu0 0
        %2007 = vmatpush1.bf16.msra.mxu0 0
        %2008 = vmatprep.subr.bf16.mxu0 0
        %2009 = vmatpush1.bf16.msra.mxu0 0
        %2010 = vmatprep.subr.bf16.mxu0 0
        %2011 = vmatpush1.bf16.msra.mxu0 0
        %2012 = vmatprep.subr.bf16.mxu0 0
        %2013 = vmatpush1.bf16.msra.mxu0 0
        %2014 = vmatprep.subr.bf16.mxu0 0
        %2015 = vmatpush1.bf16.msra.mxu0 0
        %2016 = vmatprep.subr.bf16.mxu0 0
        %2017 = vmatpush1.bf16.msra.mxu0 0
        %2018 = vmatprep.subr.bf16.mxu0 0
        %2019 = vmatpush1.bf16.msra.mxu0 0
        %2020 = vmatprep.subr.bf16.mxu0 0
        %2021 = vmatpush1.bf16.msra.mxu0 0
        %2022 = vmatprep.subr.bf16.mxu0 0
        %2023 = vmatpush1.bf16.msra.mxu0 0
        %2024 = vmatprep.subr.bf16.mxu0 0
        %2025 = vmatpush1.bf16.msra.mxu0 0
        %2026 = vmatprep.subr.bf16.mxu0 0
        %2027 = vmatpush1.bf16.msra.mxu0 0
        %2028 = vmatprep.subr.bf16.mxu0 0
        %2029 = vmatpush1.bf16.msra.mxu0 0
        %2030 = vmatprep.mubr.bf16.mxu0 0
        %2031 = vmatmul.mubr.bf16.gmra.mrb[0].mxu0 %v1996
        %v2032 = vpop.f32.mrb[0].mxu0
        %v2033 = vadd.f32 0.0, %v2032
        %v2034 = vpop.f32.mrb[0].mxu0
        %v2035 = vpop.f32.mrb[0].mxu0
        %v2036 = vpop.f32.mrb[0].mxu0
        %2037 = vdwg.mxu0
        %v2038 = vld [vmem:[#allocation13] sm:$0xf]
        %v2039 = vld [vmem:[#allocation13 + $0x4] sm:$0xf]
        %v2040 = vld [vmem:[#allocation13 + $0x8] sm:$0xf]
        %v2041 = vld [vmem:[#allocation13 + $0xc] sm:$0xf]
        %v2046 = vunpack.c.l.b16 %v2038
        %v2047 = vunpack.c.l.b16 %v2039
        %v2048 = vunpack.c.l.b16 %v2040
        %v2049 = vunpack.c.l.b16 %v2041
        %v2050 = vpack.c.b16 %v2047, %v2046
        %v2051 = vpack.c.b16 %v2049, %v2048
        %2054 = vmatprep.subr.bf16.mxu0 0
        %2055 = vmatpush1.bf16.msra.mxu0 %v2050
        %2056 = vmatprep.subr.bf16.mxu0 0
        %2057 = vmatpush1.bf16.msra.mxu0 %v2051
        %2058 = vmatprep.subr.bf16.mxu0 0
        %2059 = vmatpush1.bf16.msra.mxu0 0
        %2060 = vmatprep.subr.bf16.mxu0 0
        %2061 = vmatpush1.bf16.msra.mxu0 0
        %2062 = vmatprep.subr.bf16.mxu0 0
        %2063 = vmatpush1.bf16.msra.mxu0 0
        %2064 = vmatprep.subr.bf16.mxu0 0
        %2065 = vmatpush1.bf16.msra.mxu0 0
        %2066 = vmatprep.subr.bf16.mxu0 0
        %2067 = vmatpush1.bf16.msra.mxu0 0
        %2068 = vmatprep.subr.bf16.mxu0 0
        %2069 = vmatpush1.bf16.msra.mxu0 0
        %2070 = vmatprep.subr.bf16.mxu0 0
        %2071 = vmatpush1.bf16.msra.mxu0 0
        %2072 = vmatprep.subr.bf16.mxu0 0
        %2073 = vmatpush1.bf16.msra.mxu0 0
        %2074 = vmatprep.subr.bf16.mxu0 0
        %2075 = vmatpush1.bf16.msra.mxu0 0
        %2076 = vmatprep.subr.bf16.mxu0 0
        %2077 = vmatpush1.bf16.msra.mxu0 0
        %2078 = vmatprep.subr.bf16.mxu0 0
        %2079 = vmatpush1.bf16.msra.mxu0 0
        %2080 = vmatprep.subr.bf16.mxu0 0
        %2081 = vmatpush1.bf16.msra.mxu0 0
        %2082 = vmatprep.subr.bf16.mxu0 0
        %2083 = vmatpush1.bf16.msra.mxu0 0
        %2084 = vmatprep.subr.bf16.mxu0 0
        %2085 = vmatpush1.bf16.msra.mxu0 0
        %2086 = vmatprep.mubr.bf16.mxu0 0
        %2087 = vmatmul.mubr.bf16.gmra.mrb[0].mxu0 %v1996
        %v2088 = vpop.f32.mrb[0].mxu0
        %v2089 = vadd.f32 0.0, %v2088
        %v2090 = vpop.f32.mrb[0].mxu0
        %v2091 = vpop.f32.mrb[0].mxu0
        %v2092 = vpop.f32.mrb[0].mxu0
        %2093 = vdwg.mxu0
        %v2094 = vsub.f32 0.0, %v2033
        %v2095 = vmul.f32 %v2094, 1.442695
        %v2096 = vpow.pop %v2095
        %v2097 = vadd.f32 %v2096, 1.0
        %v2098 = vrcp.pop %v2097
        %v2099 = vmul.f32 %v2033, %v2098
        %v2100 = vmul.f32 %v2099, %v2089
        %v2101 = vpack.c.bf16 %v2100, %v2100
        %v2102 = vld [vmem:[%s12] sm:$0xf]
        %v2103 = vld [vmem:[%s12 + $0x4] sm:$0xf]
        %v2104 = vld [vmem:[%s12 + $0x8] sm:$0xf]
        %v2105 = vld [vmem:[%s12 + $0xc] sm:$0xf]
        %v2106 = vld [vmem:[%s12 + $0x10] sm:$0xf]
        %v2107 = vld [vmem:[%s12 + $0x14] sm:$0xf]
        %v2108 = vld [vmem:[%s12 + $0x18] sm:$0xf]
        %v2109 = vld [vmem:[%s12 + $0x1c] sm:$0xf]
        %v2118 = vunpack.c.l.b16 %v2102
        %v2119 = vunpack.c.l.b16 %v2103
        %v2120 = vunpack.c.l.b16 %v2104
        %v2121 = vunpack.c.l.b16 %v2105
        %v2122 = vunpack.c.l.b16 %v2106
        %v2123 = vunpack.c.l.b16 %v2107
        %v2124 = vunpack.c.l.b16 %v2108
        %v2125 = vunpack.c.l.b16 %v2109
        %v2126 = vpack.c.b16 %v2119, %v2118
        %v2127 = vpack.c.b16 %v2121, %v2120
        %v2128 = vpack.c.b16 %v2123, %v2122
        %v2129 = vpack.c.b16 %v2125, %v2124
        %vm2134 = vcmask 523264
        %v2136 = vsel %vm2134, %v2101, 0
        %2138 = vmatprep.subr.bf16.mxu0 0
        %2139 = vmatpush1.bf16.msra.mxu0 %v2126
        %2140 = vmatprep.subr.bf16.mxu0 0
        %2141 = vmatpush1.bf16.msra.mxu0 %v2127
        %2142 = vmatprep.subr.bf16.mxu0 0
        %2143 = vmatpush1.bf16.msra.mxu0 %v2128
        %2144 = vmatprep.subr.bf16.mxu0 0
        %2145 = vmatpush1.bf16.msra.mxu0 %v2129
        %2146 = vmatprep.subr.bf16.mxu0 0
        %2147 = vmatpush1.bf16.msra.mxu0 0
        %2148 = vmatprep.subr.bf16.mxu0 0
        %2149 = vmatpush1.bf16.msra.mxu0 0
        %2150 = vmatprep.subr.bf16.mxu0 0
        %2151 = vmatpush1.bf16.msra.mxu0 0
        %2152 = vmatprep.subr.bf16.mxu0 0
        %2153 = vmatpush1.bf16.msra.mxu0 0
        %2154 = vmatprep.subr.bf16.mxu0 0
        %2155 = vmatpush1.bf16.msra.mxu0 0
        %2156 = vmatprep.subr.bf16.mxu0 0
        %2157 = vmatpush1.bf16.msra.mxu0 0
        %2158 = vmatprep.subr.bf16.mxu0 0
        %2159 = vmatpush1.bf16.msra.mxu0 0
        %2160 = vmatprep.subr.bf16.mxu0 0
        %2161 = vmatpush1.bf16.msra.mxu0 0
        %2162 = vmatprep.subr.bf16.mxu0 0
        %2163 = vmatpush1.bf16.msra.mxu0 0
        %2164 = vmatprep.subr.bf16.mxu0 0
        %2165 = vmatpush1.bf16.msra.mxu0 0
        %2166 = vmatprep.subr.bf16.mxu0 0
        %2167 = vmatpush1.bf16.msra.mxu0 0
        %2168 = vmatprep.subr.bf16.mxu0 0
        %2169 = vmatpush1.bf16.msra.mxu0 0
        %2170 = vmatprep.mubr.bf16.mxu0 0
        %2171 = vmatmul.mubr.bf16.gmra.mrb[0].mxu0 %v2136
        %v2172 = vpop.f32.mrb[0].mxu0
        %v2173 = vadd.f32 0.0, %v2172
        %v2174 = vpop.f32.mrb[0].mxu0
        %v2175 = vpop.f32.mrb[0].mxu0
        %v2176 = vpop.f32.mrb[0].mxu0
        %2177 = vdwg.mxu0
        %v2178 = vadd.f32 %v1961, %v2173
        %v2179 = vld [vmem:[%s13] sm:$0x1]
        %v2180 = vmul.f32 %v2178, %v2178
        %v2181 = vsel %vm677, %v2180, 0.0
        %2182 = vadd.xlane.f32.xlu0 %v2181
        %v2183 = vpop.xlane.xlu0 %2182
        %v2184 = vmul.f32 %v2183, %v681
        %v2185 = vadd.f32 %v2184, 1e-06
        %v2186 = vrsqrt.pop %v2185
        %v2187 = vmul.f32 %v2178, %v2186
        %v2189 = vlaneseq
        %v2190 = vshrl.u32 %v2189, 7
        %v2191 = vsub.s32 0, %v2190
        %v2192 = vrot.slane %v2179, %v2191
        %v2194 = vmul.f32 %v2187, %v2192
        %v2195 = vpack.c.bf16 %v2194, %v2194
        %vm2196 = vcmask 257024
        %2197 = vst.msk [vmem:[%s563] sm:$0xf] %vm2196, %v2195
        %s2198 = sand.u32 %s344, 1
        %s2199 = scalar_lea.sflag [#allocation4], %s2198
        %s2200 = sand.u32 %s344, 1
        %s2201 = smul.addr %s2200, 4
        %s2202 = scalar_lea.vmem [#allocation14], %s2201
        // Predicated region
        $region105: #{tpu_custom_call.1} parent=75 // pred_check
          %p2203 = pneg %p354
        $region106: #{tpu_custom_call.1} parent=75 // pred_check_branch
          %2205 = sbr.rel (%p2203) target = $region108
        $region107: #{tpu_custom_call.1} parent=75 // pred_region
          %s2207 = ssub.s32 64, 64
          %2208 = vsyncadd %s2199, %s2207
          %s2209 = smul.addr %s32, 64
          %s2210 = scalar_lea.hbm %s14, %s2209
          %s2212 = sshll.u32 %s2202, 4
          %s2213 = int_to_ptr.vmem [resolvable:$true] %s2212
          %2215 = dma.vmem_to_hbm [thread:$0]  %s2213, 64, %s2210, %s2199
        $region108: #{tpu_custom_call.1} parent=75 // pred_fallthru
          _
      $region76: #{tpu_custom_call.1} parent=5 // pred_fallthru
        _
      %p2216 = scmp.le.s32.totalorder 2, %s27
      // Predicated region
      $region109: #{tpu_custom_call.1} parent=5 // pred_check
        %p2217 = pneg %p2216
      $region110: #{tpu_custom_call.1} parent=5 // pred_check_branch
        %2219 = sbr.rel (%p2217) target = $region112
      $region111: #{tpu_custom_call.1} parent=5 // pred_region
        %s2220 = ssub.s32 %s27, 2
        // Predicated region
        $region113: #{tpu_custom_call.1} parent=111 // pred_check
          %p2221 = pneg %p360
        $region114: #{tpu_custom_call.1} parent=111 // pred_check_branch
          %2223 = sbr.rel (%p2221) target = $region116
        $region115: #{tpu_custom_call.1} parent=111 // pred_region
          %s2224 = sand.u32 %s345, 1
          %s2225 = scalar_lea.sflag [#allocation4], %s2224
          %s2226 = sand.u32 %s345, 1
          %s2227 = smul.addr %s2226, 4
          %s2228 = scalar_lea.vmem [#allocation14], %s2227
          %2229 = dma.done %s2225, 64
        $region116: #{tpu_custom_call.1} parent=111 // pred_fallthru
          _
      $region112: #{tpu_custom_call.1} parent=5 // pred_fallthru
        _
    $region6: #{tpu_custom_call.1} parent=1 // loop_footer
      %s31 = sadd.s32 1, %s27
    $region7: #{tpu_custom_call.1} parent=1 // loop_footer_branch
      %26 = sbr.rel target = $region3
    $region8: #{tpu_custom_call.1} parent=1 // loop_exit
      _
    %2230 = vsyncpa [#allocation3], 1
    %s2231 = scalar_lea.sflag [#allocation3], 1
    %2232 = vsyncpa %s2231, 1
    %2233 = vsyncpa [#allocation6], 1
    %2234 = vsyncpa [#allocation9], 1
    %2235 = vsyncpa [#allocation12], 1
    %2236 = vsyncpa [#allocation4], 1
    %s2237 = scalar_lea.sflag [#allocation4], 1
    %2238 = vsyncpa %s2237, 1

</llo_original>
